<compile_context>
chip_gen: v7x
topology: tpu7x:2x2x1
jax: 0.10.0
libtpu: 0.0.40
codegen_flags: <defaults>
</compile_context>

<pallas_src>
import math
from functools import partial

import jax
import jax.numpy as jnp
from jax.experimental import pallas as pl
from jax.experimental.pallas import tpu as pltpu


# --------------------------------------------------------------------------
# Fused time-chunked kernel
# --------------------------------------------------------------------------
def _fused_chunk_kernel(x_ref, h0_ref, wxh_ref, whh_ref, who_ref,
                        bh_ref, bo_ref, y_ref, hfin_ref,
                        h_carry, h_chunk):
    """One time-chunk per grid step.

    x_ref:   (TT, B, F)  streamed chunk of inputs
    h0_ref:  (B, H)      initial hidden state (resident)
    w*_ref:  bf16 weights (resident), b*_ref: f32 biases (resident)
    y_ref:   (TT, B, F)  output chunk (skip-add fused)
    hfin_ref:(B, H)      final hidden state (resident output, last write wins)
    h_carry: (B, H)  f32 VMEM scratch — hidden state carried across chunks
    h_chunk: (TT, B, H) f32 VMEM scratch — per-chunk pre-activations / hiddens
    """
    c = pl.program_id(0)
    TT, B, F = x_ref.shape
    H = h_carry.shape[-1]

    @pl.when(c == 0)
    def _():
        h_carry[...] = h0_ref[...]

    # (1) Chunk-batched input projection: pre = x @ Wxh + b_h   (M = TT*B)
    x2d = x_ref[...].reshape(TT * B, F)
    pre = (
        jnp.dot(x2d.astype(jnp.bfloat16), wxh_ref[...],
                preferred_element_type=jnp.float32)
        + bh_ref[...]
    )
    h_chunk[...] = pre.reshape(TT, B, H)

    # (2) Serial recurrence within the chunk; Whh stays resident, the hidden
    #     state lives in VMEM scratch, h_chunk[t] is overwritten in place.
    whh = whh_ref[...]

    def step(t, carry):
        h = h_carry[...]
        h_new = jnp.tanh(
            h_chunk[t]
            + jnp.dot(h.astype(jnp.bfloat16), whh,
                      preferred_element_type=jnp.float32)
        )
        h_chunk[t] = h_new
        h_carry[...] = h_new
        return carry

    jax.lax.fori_loop(0, TT, step, 0, unroll=True)

    # (3) Chunk-batched output projection with fused residual skip-add.
    h2d = h_chunk[...].reshape(TT * B, H)
    y2d = (
        jnp.dot(h2d.astype(jnp.bfloat16), who_ref[...],
                preferred_element_type=jnp.float32)
        + bo_ref[...]
        + x2d
    )
    y_ref[...] = y2d.reshape(TT, B, F).astype(y_ref.dtype)

    # (4) Final hidden state: resident output block, only the last chunk's
    #     value survives writeback (f32, no precision loss).
    hfin_ref[...] = h_carry[...]


# --------------------------------------------------------------------------
# Wrappers
# --------------------------------------------------------------------------
@partial(jax.jit, static_argnames=("chunk_steps",))
def recurrent_model_with_skip_add_seq(x_seq, h0, params, chunk_steps=16):
    """Apply the RecurrentModelWithSkipAdd step over a whole sequence.

    x_seq: [T, B, F] (float32), h0: [B, H] (float32)
    returns (y_seq [T, B, F], h_final [B, H])
    Assumes B multiple of 8 and F, H multiples of 128 for clean tiling.
    """
    wxh, whh, bh, who, bo = params
    T, B, F = x_seq.shape
    H = h0.shape[-1]

    TT = math.gcd(T, min(chunk_steps, T))   # chunk size dividing T
    n_chunks = T // TT

    grid_spec = pltpu.PrefetchScalarGridSpec(
        num_scalar_prefetch=0,
        grid=(n_chunks,),
        in_specs=[
            pl.BlockSpec((TT, B, F), lambda c: (c, 0, 0)),   # x chunk (streamed)
            pl.BlockSpec((B, H), lambda c: (0, 0)),          # h0     (resident)
            pl.BlockSpec((F, H), lambda c: (0, 0)),          # Wxh    (resident)
            pl.BlockSpec((H, H), lambda c: (0, 0)),          # Whh    (resident)
            pl.BlockSpec((H, F), lambda c: (0, 0)),          # Who    (resident)
            pl.BlockSpec((1, H), lambda c: (0, 0)),          # b_h    (resident)
            pl.BlockSpec((1, F), lambda c: (0, 0)),          # b_o    (resident)
        ],
        out_specs=[
            pl.BlockSpec((TT, B, F), lambda c: (c, 0, 0)),   # y chunk
            pl.BlockSpec((B, H), lambda c: (0, 0)),          # h_final (resident)
        ],
        scratch_shapes=[
            pltpu.VMEM((B, H), jnp.float32),        # carried hidden state
            pltpu.VMEM((TT, B, H), jnp.float32),    # per-chunk pre/h buffer
        ],
    )

    y_seq, h_final = pl.pallas_call(
        _fused_chunk_kernel,
        out_shape=(
            jax.ShapeDtypeStruct((T, B, F), x_seq.dtype),
            jax.ShapeDtypeStruct((B, H), jnp.float32),
        ),
        grid_spec=grid_spec,
        compiler_params=pltpu.CompilerParams(
            dimension_semantics=("arbitrary",)),   # time is truly sequential
    )(x_seq, h0, wxh, whh, who, bh, bo)

    return y_seq, h_final


def recurrent_model_with_skip_add(x, hiddens, params):
    """Single-step API matching the PyTorch forward(x, hiddens) signature."""
    y_seq, h_new = recurrent_model_with_skip_add_seq(
        x[None], hiddens, params, chunk_steps=1)
    return y_seq[0], h_new


def init_params(key, feature_dim, hidden_dim):
    """Deterministic synthetic parameter init (bf16 weights, f32 biases)."""
    k1, k2, k3, k4, k5 = jax.random.split(key, 5)
    scale_x = 1.0 / jnp.sqrt(feature_dim)
    scale_h = 1.0 / jnp.sqrt(hidden_dim)
    wxh = (jax.random.normal(k1, (feature_dim, hidden_dim), jnp.float32)
           * scale_x).astype(jnp.bfloat16)
    whh = (jax.random.normal(k2, (hidden_dim, hidden_dim), jnp.float32)
           * scale_h).astype(jnp.bfloat16)
    who = (jax.random.normal(k3, (hidden_dim, feature_dim), jnp.float32)
           * scale_h).astype(jnp.bfloat16)
    bh = jax.random.normal(k4, (1, hidden_dim), jnp.float32) * 0.1
    bo = jax.random.normal(k5, (1, feature_dim), jnp.float32) * 0.1
    return (wxh, whh, bh, who, bo)


# --------------------------------------------------------------------------
# Pure-JAX reference (same dtype path: bf16 matmul inputs, f32 accumulation)
# --------------------------------------------------------------------------
def _reference(x_seq, h0, params):
    wxh, whh, bh, who, bo = params
    T, B, F = x_seq.shape
    H = h0.shape[-1]
    x2d = x_seq.reshape(T * B, F)
    pre = (jnp.dot(x2d.astype(jnp.bfloat16), wxh,
                   preferred_element_type=jnp.float32) + bh).reshape(T, B, H)

    def step(h, pre_t):
        h_new = jnp.tanh(pre_t + jnp.dot(h.astype(jnp.bfloat16), whh,
                                         preferred_element_type=jnp.float32))
        return h_new, h_new

    h_final, h_all = jax.lax.scan(step, h0, pre)
    y2d = (jnp.dot(h_all.reshape(T * B, H).astype(jnp.bfloat16), who,
                   preferred_element_type=jnp.float32) + bo + x2d)
    return y2d.reshape(T, B, F), h_final


if __name__ == "__main__":
    # Small, (8,128)-tile-friendly shapes; 2 chunks of 16 steps each.
    T, B, F, H = 32, 8, 128, 128

    key = jax.random.PRNGKey(0)
    kx, kh, kp = jax.random.split(key, 3)
    x_seq = jax.random.normal(kx, (T, B, F), jnp.float32)
    hiddens = jax.random.normal(kh, (B, H), jnp.float32)
    params = init_params(kp, F, H)

    y_seq, h_final = recurrent_model_with_skip_add_seq(x_seq, hiddens, params)
    jax.block_until_ready((y_seq, h_final))

    y_ref, h_ref = _reference(x_seq, hiddens, params)
    assert jnp.allclose(y_seq, y_ref, atol=1e-2, rtol=1e-2)
    assert jnp.allclose(h_final, h_ref, atol=1e-2, rtol=1e-2)

    # Single-step API (matches the PyTorch forward signature) also works.
    y1, h1 = recurrent_model_with_skip_add(x_seq[0], hiddens, params)
    jax.block_until_ready((y1, h1))
    y1_ref, h1_ref = _reference(x_seq[:1], hiddens, params)
    assert jnp.allclose(y1, y1_ref[0], atol=1e-2, rtol=1e-2)
    assert jnp.allclose(h1, h1_ref, atol=1e-2, rtol=1e-2)

    print("KERNEL_OK")
</pallas_src>

<mosaic_0001>
module attributes {stable_mosaic.version = 11 : i64} {
  func.func @_fused_chunk_kernel(%arg0: i32, %arg1: memref<16x8x128xf32, #tpu.memory_space<vmem>>, %arg2: memref<8x128xf32, #tpu.memory_space<vmem>>, %arg3: memref<128x128xbf16, #tpu.memory_space<vmem>>, %arg4: memref<128x128xbf16, #tpu.memory_space<vmem>>, %arg5: memref<128x128xbf16, #tpu.memory_space<vmem>>, %arg6: memref<1x128xf32, #tpu.memory_space<vmem>>, %arg7: memref<1x128xf32, #tpu.memory_space<vmem>>, %arg8: memref<16x8x128xf32, #tpu.memory_space<vmem>>, %arg9: memref<8x128xf32, #tpu.memory_space<vmem>>, %arg10: memref<8x128xf32, #tpu.memory_space<vmem>>, %arg11: memref<16x8x128xf32, #tpu.memory_space<vmem>>) attributes {dimension_semantics = [#tpu.dimension_semantics<arbitrary>], iteration_bounds = array<i64: 2>, scalar_prefetch = 0 : i64, scratch_operands = 2 : i64, tpu.core_type = #tpu.core_type<tc>, window_params = [{transform_indices = @transform_0, window_bounds = array<i64: 16, 8, 128>}, {pipeline_mode = #tpu.pipeline_mode<synchronous>, transform_indices = @transform_1, window_bounds = array<i64: 8, 128>}, {pipeline_mode = #tpu.pipeline_mode<synchronous>, transform_indices = @transform_2, window_bounds = array<i64: 128, 128>}, {pipeline_mode = #tpu.pipeline_mode<synchronous>, transform_indices = @transform_3, window_bounds = array<i64: 128, 128>}, {pipeline_mode = #tpu.pipeline_mode<synchronous>, transform_indices = @transform_4, window_bounds = array<i64: 128, 128>}, {pipeline_mode = #tpu.pipeline_mode<synchronous>, transform_indices = @transform_5, window_bounds = array<i64: 1, 128>}, {pipeline_mode = #tpu.pipeline_mode<synchronous>, transform_indices = @transform_6, window_bounds = array<i64: 1, 128>}, {transform_indices = @transform_7, window_bounds = array<i64: 16, 8, 128>}, {pipeline_mode = #tpu.pipeline_mode<synchronous>, transform_indices = @transform_8, window_bounds = array<i64: 8, 128>}]} {
    %c0_i32 = arith.constant 0 : i32
    %0 = arith.cmpi eq, %arg0, %c0_i32 : i32
    %1 = arith.extui %0 : i1 to i32
    %c0_i32_0 = arith.constant 0 : i32
    %2 = arith.cmpi ne, %1, %c0_i32_0 : i32
    scf.if %2 {
      %c0_172 = arith.constant 0 : index
      %c0_173 = arith.constant 0 : index
      %235 = vector.load %arg2[%c0_172, %c0_173] : memref<8x128xf32, #tpu.memory_space<vmem>>, vector<8x128xf32>
      %c0_174 = arith.constant 0 : index
      %c0_175 = arith.constant 0 : index
      %236 = vector.load %arg10[%c0_174, %c0_175] : memref<8x128xf32, #tpu.memory_space<vmem>>, vector<8x128xf32>
      tpu.vector_store %arg10[%c0_174, %c0_175], %235 {strides = array<i32>} : memref<8x128xf32, #tpu.memory_space<vmem>>, vector<8x128xf32>,
    } else {
    }
    %c0 = arith.constant 0 : index
    %c0_1 = arith.constant 0 : index
    %c0_2 = arith.constant 0 : index
    %3 = vector.load %arg1[%c0, %c0_1, %c0_2] : memref<16x8x128xf32, #tpu.memory_space<vmem>>, vector<16x8x128xf32>
    %4 = vector.shape_cast %3 : vector<16x8x128xf32> to vector<128x128xf32>
    %5 = arith.truncf %4 : vector<128x128xf32> to vector<128x128xbf16>
    %c0_3 = arith.constant 0 : index
    %c0_4 = arith.constant 0 : index
    %6 = vector.load %arg3[%c0_3, %c0_4] : memref<128x128xbf16, #tpu.memory_space<vmem>>, vector<128x128xbf16>
    %cst = arith.constant dense<0.000000e+00> : vector<128x128xf32>
    %7 = tpu.matmul %5, %6, %cst {dimension_numbers = #tpu.dot_dimension_numbers<[1], [0], [0], [1], [0, 0, 1, 1], [], []>} : vector<128x128xbf16>, vector<128x128xbf16>, vector<128x128xf32> -> vector<128x128xf32>
    %c0_5 = arith.constant 0 : index
    %c0_6 = arith.constant 0 : index
    %8 = vector.load %arg6[%c0_5, %c0_6] : memref<1x128xf32, #tpu.memory_space<vmem>>, vector<1x128xf32>
    %9 = vector.broadcast %8 : vector<1x128xf32> to vector<128x128xf32>
    %10 = arith.addf %7, %9 : vector<128x128xf32>
    %11 = vector.shape_cast %10 : vector<128x128xf32> to vector<16x8x128xf32>
    %c0_7 = arith.constant 0 : index
    %c0_8 = arith.constant 0 : index
    %c0_9 = arith.constant 0 : index
    %12 = vector.load %arg11[%c0_7, %c0_8, %c0_9] : memref<16x8x128xf32, #tpu.memory_space<vmem>>, vector<16x8x128xf32>
    tpu.vector_store %arg11[%c0_7, %c0_8, %c0_9], %11 {strides = array<i32>} : memref<16x8x128xf32, #tpu.memory_space<vmem>>, vector<16x8x128xf32>,
    %c0_10 = arith.constant 0 : index
    %c0_11 = arith.constant 0 : index
    %13 = vector.load %arg4[%c0_10, %c0_11] : memref<128x128xbf16, #tpu.memory_space<vmem>>, vector<128x128xbf16>
    %c0_i32_12 = arith.constant 0 : i32
    %c0_13 = arith.constant 0 : index
    %c0_14 = arith.constant 0 : index
    %14 = vector.load %arg10[%c0_13, %c0_14] : memref<8x128xf32, #tpu.memory_space<vmem>>, vector<8x128xf32>
    %15 = arith.index_cast %c0_i32_12 : i32 to index
    %c0_15 = arith.constant 0 : index
    %c0_16 = arith.constant 0 : index
    %16 = vector.load %arg11[%15, %c0_15, %c0_16] : memref<16x8x128xf32, #tpu.memory_space<vmem>>, vector<1x8x128xf32>
    %17 = vector.shape_cast %16 : vector<1x8x128xf32> to vector<8x128xf32>
    %18 = arith.truncf %14 : vector<8x128xf32> to vector<8x128xbf16>
    %cst_17 = arith.constant dense<0.000000e+00> : vector<8x128xf32>
    %19 = tpu.matmul %18, %13, %cst_17 {dimension_numbers = #tpu.dot_dimension_numbers<[1], [0], [0], [1], [0, 0, 1, 1], [], []>} : vector<8x128xbf16>, vector<128x128xbf16>, vector<8x128xf32> -> vector<8x128xf32>
    %20 = arith.addf %17, %19 : vector<8x128xf32>
    %21 = math.tanh %20 : vector<8x128xf32>
    %22 = arith.index_cast %c0_i32_12 : i32 to index
    %c0_18 = arith.constant 0 : index
    %c0_19 = arith.constant 0 : index
    %23 = vector.load %arg11[%22, %c0_18, %c0_19] : memref<16x8x128xf32, #tpu.memory_space<vmem>>, vector<1x8x128xf32>
    %24 = vector.shape_cast %23 : vector<1x8x128xf32> to vector<8x128xf32>
    %25 = vector.shape_cast %21 : vector<8x128xf32> to vector<1x8x128xf32>
    tpu.vector_store %arg11[%22, %c0_18, %c0_19], %25 {strides = array<i32>} : memref<16x8x128xf32, #tpu.memory_space<vmem>>, vector<1x8x128xf32>,
    %c0_20 = arith.constant 0 : index
    %c0_21 = arith.constant 0 : index
    %26 = vector.load %arg10[%c0_20, %c0_21] : memref<8x128xf32, #tpu.memory_space<vmem>>, vector<8x128xf32>
    tpu.vector_store %arg10[%c0_20, %c0_21], %21 {strides = array<i32>} : memref<8x128xf32, #tpu.memory_space<vmem>>, vector<8x128xf32>,
    %c1_i32 = arith.constant 1 : i32
    %c0_22 = arith.constant 0 : index
    %c0_23 = arith.constant 0 : index
    %27 = vector.load %arg10[%c0_22, %c0_23] : memref<8x128xf32, #tpu.memory_space<vmem>>, vector<8x128xf32>
    %28 = arith.index_cast %c1_i32 : i32 to index
    %c0_24 = arith.constant 0 : index
    %c0_25 = arith.constant 0 : index
    %29 = vector.load %arg11[%28, %c0_24, %c0_25] : memref<16x8x128xf32, #tpu.memory_space<vmem>>, vector<1x8x128xf32>
    %30 = vector.shape_cast %29 : vector<1x8x128xf32> to vector<8x128xf32>
    %31 = arith.truncf %27 : vector<8x128xf32> to vector<8x128xbf16>
    %cst_26 = arith.constant dense<0.000000e+00> : vector<8x128xf32>
    %32 = tpu.matmul %31, %13, %cst_26 {dimension_numbers = #tpu.dot_dimension_numbers<[1], [0], [0], [1], [0, 0, 1, 1], [], []>} : vector<8x128xbf16>, vector<128x128xbf16>, vector<8x128xf32> -> vector<8x128xf32>
    %33 = arith.addf %30, %32 : vector<8x128xf32>
    %34 = math.tanh %33 : vector<8x128xf32>
    %35 = arith.index_cast %c1_i32 : i32 to index
    %c0_27 = arith.constant 0 : index
    %c0_28 = arith.constant 0 : index
    %36 = vector.load %arg11[%35, %c0_27, %c0_28] : memref<16x8x128xf32, #tpu.memory_space<vmem>>, vector<1x8x128xf32>
    %37 = vector.shape_cast %36 : vector<1x8x128xf32> to vector<8x128xf32>
    %38 = vector.shape_cast %34 : vector<8x128xf32> to vector<1x8x128xf32>
    tpu.vector_store %arg11[%35, %c0_27, %c0_28], %38 {strides = array<i32>} : memref<16x8x128xf32, #tpu.memory_space<vmem>>, vector<1x8x128xf32>,
    %c0_29 = arith.constant 0 : index
    %c0_30 = arith.constant 0 : index
    %39 = vector.load %arg10[%c0_29, %c0_30] : memref<8x128xf32, #tpu.memory_space<vmem>>, vector<8x128xf32>
    tpu.vector_store %arg10[%c0_29, %c0_30], %34 {strides = array<i32>} : memref<8x128xf32, #tpu.memory_space<vmem>>, vector<8x128xf32>,
    %c2_i32 = arith.constant 2 : i32
    %c0_31 = arith.constant 0 : index
    %c0_32 = arith.constant 0 : index
    %40 = vector.load %arg10[%c0_31, %c0_32] : memref<8x128xf32, #tpu.memory_space<vmem>>, vector<8x128xf32>
    %41 = arith.index_cast %c2_i32 : i32 to index
    %c0_33 = arith.constant 0 : index
    %c0_34 = arith.constant 0 : index
    %42 = vector.load %arg11[%41, %c0_33, %c0_34] : memref<16x8x128xf32, #tpu.memory_space<vmem>>, vector<1x8x128xf32>
    %43 = vector.shape_cast %42 : vector<1x8x128xf32> to vector<8x128xf32>
    %44 = arith.truncf %40 : vector<8x128xf32> to vector<8x128xbf16>
    %cst_35 = arith.constant dense<0.000000e+00> : vector<8x128xf32>
    %45 = tpu.matmul %44, %13, %cst_35 {dimension_numbers = #tpu.dot_dimension_numbers<[1], [0], [0], [1], [0, 0, 1, 1], [], []>} : vector<8x128xbf16>, vector<128x128xbf16>, vector<8x128xf32> -> vector<8x128xf32>
    %46 = arith.addf %43, %45 : vector<8x128xf32>
    %47 = math.tanh %46 : vector<8x128xf32>
    %48 = arith.index_cast %c2_i32 : i32 to index
    %c0_36 = arith.constant 0 : index
    %c0_37 = arith.constant 0 : index
    %49 = vector.load %arg11[%48, %c0_36, %c0_37] : memref<16x8x128xf32, #tpu.memory_space<vmem>>, vector<1x8x128xf32>
    %50 = vector.shape_cast %49 : vector<1x8x128xf32> to vector<8x128xf32>
    %51 = vector.shape_cast %47 : vector<8x128xf32> to vector<1x8x128xf32>
    tpu.vector_store %arg11[%48, %c0_36, %c0_37], %51 {strides = array<i32>} : memref<16x8x128xf32, #tpu.memory_space<vmem>>, vector<1x8x128xf32>,
    %c0_38 = arith.constant 0 : index
    %c0_39 = arith.constant 0 : index
    %52 = vector.load %arg10[%c0_38, %c0_39] : memref<8x128xf32, #tpu.memory_space<vmem>>, vector<8x128xf32>
    tpu.vector_store %arg10[%c0_38, %c0_39], %47 {strides = array<i32>} : memref<8x128xf32, #tpu.memory_space<vmem>>, vector<8x128xf32>,
    %c3_i32 = arith.constant 3 : i32
    %c0_40 = arith.constant 0 : index
    %c0_41 = arith.constant 0 : index
    %53 = vector.load %arg10[%c0_40, %c0_41] : memref<8x128xf32, #tpu.memory_space<vmem>>, vector<8x128xf32>
    %54 = arith.index_cast %c3_i32 : i32 to index
    %c0_42 = arith.constant 0 : index
    %c0_43 = arith.constant 0 : index
    %55 = vector.load %arg11[%54, %c0_42, %c0_43] : memref<16x8x128xf32, #tpu.memory_space<vmem>>, vector<1x8x128xf32>
    %56 = vector.shape_cast %55 : vector<1x8x128xf32> to vector<8x128xf32>
    %57 = arith.truncf %53 : vector<8x128xf32> to vector<8x128xbf16>
    %cst_44 = arith.constant dense<0.000000e+00> : vector<8x128xf32>
    %58 = tpu.matmul %57, %13, %cst_44 {dimension_numbers = #tpu.dot_dimension_numbers<[1], [0], [0], [1], [0, 0, 1, 1], [], []>} : vector<8x128xbf16>, vector<128x128xbf16>, vector<8x128xf32> -> vector<8x128xf32>
    %59 = arith.addf %56, %58 : vector<8x128xf32>
    %60 = math.tanh %59 : vector<8x128xf32>
    %61 = arith.index_cast %c3_i32 : i32 to index
    %c0_45 = arith.constant 0 : index
    %c0_46 = arith.constant 0 : index
    %62 = vector.load %arg11[%61, %c0_45, %c0_46] : memref<16x8x128xf32, #tpu.memory_space<vmem>>, vector<1x8x128xf32>
    %63 = vector.shape_cast %62 : vector<1x8x128xf32> to vector<8x128xf32>
    %64 = vector.shape_cast %60 : vector<8x128xf32> to vector<1x8x128xf32>
    tpu.vector_store %arg11[%61, %c0_45, %c0_46], %64 {strides = array<i32>} : memref<16x8x128xf32, #tpu.memory_space<vmem>>, vector<1x8x128xf32>,
    %c0_47 = arith.constant 0 : index
    %c0_48 = arith.constant 0 : index
    %65 = vector.load %arg10[%c0_47, %c0_48] : memref<8x128xf32, #tpu.memory_space<vmem>>, vector<8x128xf32>
    tpu.vector_store %arg10[%c0_47, %c0_48], %60 {strides = array<i32>} : memref<8x128xf32, #tpu.memory_space<vmem>>, vector<8x128xf32>,
    %c4_i32 = arith.constant 4 : i32
    %c0_49 = arith.constant 0 : index
    %c0_50 = arith.constant 0 : index
    %66 = vector.load %arg10[%c0_49, %c0_50] : memref<8x128xf32, #tpu.memory_space<vmem>>, vector<8x128xf32>
    %67 = arith.index_cast %c4_i32 : i32 to index
    %c0_51 = arith.constant 0 : index
    %c0_52 = arith.constant 0 : index
    %68 = vector.load %arg11[%67, %c0_51, %c0_52] : memref<16x8x128xf32, #tpu.memory_space<vmem>>, vector<1x8x128xf32>
    %69 = vector.shape_cast %68 : vector<1x8x128xf32> to vector<8x128xf32>
    %70 = arith.truncf %66 : vector<8x128xf32> to vector<8x128xbf16>
    %cst_53 = arith.constant dense<0.000000e+00> : vector<8x128xf32>
    %71 = tpu.matmul %70, %13, %cst_53 {dimension_numbers = #tpu.dot_dimension_numbers<[1], [0], [0], [1], [0, 0, 1, 1], [], []>} : vector<8x128xbf16>, vector<128x128xbf16>, vector<8x128xf32> -> vector<8x128xf32>
    %72 = arith.addf %69, %71 : vector<8x128xf32>
    %73 = math.tanh %72 : vector<8x128xf32>
    %74 = arith.index_cast %c4_i32 : i32 to index
    %c0_54 = arith.constant 0 : index
    %c0_55 = arith.constant 0 : index
    %75 = vector.load %arg11[%74, %c0_54, %c0_55] : memref<16x8x128xf32, #tpu.memory_space<vmem>>, vector<1x8x128xf32>
    %76 = vector.shape_cast %75 : vector<1x8x128xf32> to vector<8x128xf32>
    %77 = vector.shape_cast %73 : vector<8x128xf32> to vector<1x8x128xf32>
    tpu.vector_store %arg11[%74, %c0_54, %c0_55], %77 {strides = array<i32>} : memref<16x8x128xf32, #tpu.memory_space<vmem>>, vector<1x8x128xf32>,
    %c0_56 = arith.constant 0 : index
    %c0_57 = arith.constant 0 : index
    %78 = vector.load %arg10[%c0_56, %c0_57] : memref<8x128xf32, #tpu.memory_space<vmem>>, vector<8x128xf32>
    tpu.vector_store %arg10[%c0_56, %c0_57], %73 {strides = array<i32>} : memref<8x128xf32, #tpu.memory_space<vmem>>, vector<8x128xf32>,
    %c5_i32 = arith.constant 5 : i32
    %c0_58 = arith.constant 0 : index
    %c0_59 = arith.constant 0 : index
    %79 = vector.load %arg10[%c0_58, %c0_59] : memref<8x128xf32, #tpu.memory_space<vmem>>, vector<8x128xf32>
    %80 = arith.index_cast %c5_i32 : i32 to index
    %c0_60 = arith.constant 0 : index
    %c0_61 = arith.constant 0 : index
    %81 = vector.load %arg11[%80, %c0_60, %c0_61] : memref<16x8x128xf32, #tpu.memory_space<vmem>>, vector<1x8x128xf32>
    %82 = vector.shape_cast %81 : vector<1x8x128xf32> to vector<8x128xf32>
    %83 = arith.truncf %79 : vector<8x128xf32> to vector<8x128xbf16>
    %cst_62 = arith.constant dense<0.000000e+00> : vector<8x128xf32>
    %84 = tpu.matmul %83, %13, %cst_62 {dimension_numbers = #tpu.dot_dimension_numbers<[1], [0], [0], [1], [0, 0, 1, 1], [], []>} : vector<8x128xbf16>, vector<128x128xbf16>, vector<8x128xf32> -> vector<8x128xf32>
    %85 = arith.addf %82, %84 : vector<8x128xf32>
    %86 = math.tanh %85 : vector<8x128xf32>
    %87 = arith.index_cast %c5_i32 : i32 to index
    %c0_63 = arith.constant 0 : index
    %c0_64 = arith.constant 0 : index
    %88 = vector.load %arg11[%87, %c0_63, %c0_64] : memref<16x8x128xf32, #tpu.memory_space<vmem>>, vector<1x8x128xf32>
    %89 = vector.shape_cast %88 : vector<1x8x128xf32> to vector<8x128xf32>
    %90 = vector.shape_cast %86 : vector<8x128xf32> to vector<1x8x128xf32>
    tpu.vector_store %arg11[%87, %c0_63, %c0_64], %90 {strides = array<i32>} : memref<16x8x128xf32, #tpu.memory_space<vmem>>, vector<1x8x128xf32>,
    %c0_65 = arith.constant 0 : index
    %c0_66 = arith.constant 0 : index
    %91 = vector.load %arg10[%c0_65, %c0_66] : memref<8x128xf32, #tpu.memory_space<vmem>>, vector<8x128xf32>
    tpu.vector_store %arg10[%c0_65, %c0_66], %86 {strides = array<i32>} : memref<8x128xf32, #tpu.memory_space<vmem>>, vector<8x128xf32>,
    %c6_i32 = arith.constant 6 : i32
    %c0_67 = arith.constant 0 : index
    %c0_68 = arith.constant 0 : index
    %92 = vector.load %arg10[%c0_67, %c0_68] : memref<8x128xf32, #tpu.memory_space<vmem>>, vector<8x128xf32>
    %93 = arith.index_cast %c6_i32 : i32 to index
    %c0_69 = arith.constant 0 : index
    %c0_70 = arith.constant 0 : index
    %94 = vector.load %arg11[%93, %c0_69, %c0_70] : memref<16x8x128xf32, #tpu.memory_space<vmem>>, vector<1x8x128xf32>
    %95 = vector.shape_cast %94 : vector<1x8x128xf32> to vector<8x128xf32>
    %96 = arith.truncf %92 : vector<8x128xf32> to vector<8x128xbf16>
    %cst_71 = arith.constant dense<0.000000e+00> : vector<8x128xf32>
    %97 = tpu.matmul %96, %13, %cst_71 {dimension_numbers = #tpu.dot_dimension_numbers<[1], [0], [0], [1], [0, 0, 1, 1], [], []>} : vector<8x128xbf16>, vector<128x128xbf16>, vector<8x128xf32> -> vector<8x128xf32>
    %98 = arith.addf %95, %97 : vector<8x128xf32>
    %99 = math.tanh %98 : vector<8x128xf32>
    %100 = arith.index_cast %c6_i32 : i32 to index
    %c0_72 = arith.constant 0 : index
    %c0_73 = arith.constant 0 : index
    %101 = vector.load %arg11[%100, %c0_72, %c0_73] : memref<16x8x128xf32, #tpu.memory_space<vmem>>, vector<1x8x128xf32>
    %102 = vector.shape_cast %101 : vector<1x8x128xf32> to vector<8x128xf32>
    %103 = vector.shape_cast %99 : vector<8x128xf32> to vector<1x8x128xf32>
    tpu.vector_store %arg11[%100, %c0_72, %c0_73], %103 {strides = array<i32>} : memref<16x8x128xf32, #tpu.memory_space<vmem>>, vector<1x8x128xf32>,
    %c0_74 = arith.constant 0 : index
    %c0_75 = arith.constant 0 : index
    %104 = vector.load %arg10[%c0_74, %c0_75] : memref<8x128xf32, #tpu.memory_space<vmem>>, vector<8x128xf32>
    tpu.vector_store %arg10[%c0_74, %c0_75], %99 {strides = array<i32>} : memref<8x128xf32, #tpu.memory_space<vmem>>, vector<8x128xf32>,
    %c7_i32 = arith.constant 7 : i32
    %c0_76 = arith.constant 0 : index
    %c0_77 = arith.constant 0 : index
    %105 = vector.load %arg10[%c0_76, %c0_77] : memref<8x128xf32, #tpu.memory_space<vmem>>, vector<8x128xf32>
    %106 = arith.index_cast %c7_i32 : i32 to index
    %c0_78 = arith.constant 0 : index
    %c0_79 = arith.constant 0 : index
    %107 = vector.load %arg11[%106, %c0_78, %c0_79] : memref<16x8x128xf32, #tpu.memory_space<vmem>>, vector<1x8x128xf32>
    %108 = vector.shape_cast %107 : vector<1x8x128xf32> to vector<8x128xf32>
    %109 = arith.truncf %105 : vector<8x128xf32> to vector<8x128xbf16>
    %cst_80 = arith.constant dense<0.000000e+00> : vector<8x128xf32>
    %110 = tpu.matmul %109, %13, %cst_80 {dimension_numbers = #tpu.dot_dimension_numbers<[1], [0], [0], [1], [0, 0, 1, 1], [], []>} : vector<8x128xbf16>, vector<128x128xbf16>, vector<8x128xf32> -> vector<8x128xf32>
    %111 = arith.addf %108, %110 : vector<8x128xf32>
    %112 = math.tanh %111 : vector<8x128xf32>
    %113 = arith.index_cast %c7_i32 : i32 to index
    %c0_81 = arith.constant 0 : index
    %c0_82 = arith.constant 0 : index
    %114 = vector.load %arg11[%113, %c0_81, %c0_82] : memref<16x8x128xf32, #tpu.memory_space<vmem>>, vector<1x8x128xf32>
    %115 = vector.shape_cast %114 : vector<1x8x128xf32> to vector<8x128xf32>
    %116 = vector.shape_cast %112 : vector<8x128xf32> to vector<1x8x128xf32>
    tpu.vector_store %arg11[%113, %c0_81, %c0_82], %116 {strides = array<i32>} : memref<16x8x128xf32, #tpu.memory_space<vmem>>, vector<1x8x128xf32>,
    %c0_83 = arith.constant 0 : index
    %c0_84 = arith.constant 0 : index
    %117 = vector.load %arg10[%c0_83, %c0_84] : memref<8x128xf32, #tpu.memory_space<vmem>>, vector<8x128xf32>
    tpu.vector_store %arg10[%c0_83, %c0_84], %112 {strides = array<i32>} : memref<8x128xf32, #tpu.memory_space<vmem>>, vector<8x128xf32>,
    %c8_i32 = arith.constant 8 : i32
    %c0_85 = arith.constant 0 : index
    %c0_86 = arith.constant 0 : index
    %118 = vector.load %arg10[%c0_85, %c0_86] : memref<8x128xf32, #tpu.memory_space<vmem>>, vector<8x128xf32>
    %119 = arith.index_cast %c8_i32 : i32 to index
    %c0_87 = arith.constant 0 : index
    %c0_88 = arith.constant 0 : index
    %120 = vector.load %arg11[%119, %c0_87, %c0_88] : memref<16x8x128xf32, #tpu.memory_space<vmem>>, vector<1x8x128xf32>
    %121 = vector.shape_cast %120 : vector<1x8x128xf32> to vector<8x128xf32>
    %122 = arith.truncf %118 : vector<8x128xf32> to vector<8x128xbf16>
    %cst_89 = arith.constant dense<0.000000e+00> : vector<8x128xf32>
    %123 = tpu.matmul %122, %13, %cst_89 {dimension_numbers = #tpu.dot_dimension_numbers<[1], [0], [0], [1], [0, 0, 1, 1], [], []>} : vector<8x128xbf16>, vector<128x128xbf16>, vector<8x128xf32> -> vector<8x128xf32>
    %124 = arith.addf %121, %123 : vector<8x128xf32>
    %125 = math.tanh %124 : vector<8x128xf32>
    %126 = arith.index_cast %c8_i32 : i32 to index
    %c0_90 = arith.constant 0 : index
    %c0_91 = arith.constant 0 : index
    %127 = vector.load %arg11[%126, %c0_90, %c0_91] : memref<16x8x128xf32, #tpu.memory_space<vmem>>, vector<1x8x128xf32>
    %128 = vector.shape_cast %127 : vector<1x8x128xf32> to vector<8x128xf32>
    %129 = vector.shape_cast %125 : vector<8x128xf32> to vector<1x8x128xf32>
    tpu.vector_store %arg11[%126, %c0_90, %c0_91], %129 {strides = array<i32>} : memref<16x8x128xf32, #tpu.memory_space<vmem>>, vector<1x8x128xf32>,
    %c0_92 = arith.constant 0 : index
    %c0_93 = arith.constant 0 : index
    %130 = vector.load %arg10[%c0_92, %c0_93] : memref<8x128xf32, #tpu.memory_space<vmem>>, vector<8x128xf32>
    tpu.vector_store %arg10[%c0_92, %c0_93], %125 {strides = array<i32>} : memref<8x128xf32, #tpu.memory_space<vmem>>, vector<8x128xf32>,
    %c9_i32 = arith.constant 9 : i32
    %c0_94 = arith.constant 0 : index
    %c0_95 = arith.constant 0 : index
    %131 = vector.load %arg10[%c0_94, %c0_95] : memref<8x128xf32, #tpu.memory_space<vmem>>, vector<8x128xf32>
    %132 = arith.index_cast %c9_i32 : i32 to index
    %c0_96 = arith.constant 0 : index
    %c0_97 = arith.constant 0 : index
    %133 = vector.load %arg11[%132, %c0_96, %c0_97] : memref<16x8x128xf32, #tpu.memory_space<vmem>>, vector<1x8x128xf32>
    %134 = vector.shape_cast %133 : vector<1x8x128xf32> to vector<8x128xf32>
    %135 = arith.truncf %131 : vector<8x128xf32> to vector<8x128xbf16>
    %cst_98 = arith.constant dense<0.000000e+00> : vector<8x128xf32>
    %136 = tpu.matmul %135, %13, %cst_98 {dimension_numbers = #tpu.dot_dimension_numbers<[1], [0], [0], [1], [0, 0, 1, 1], [], []>} : vector<8x128xbf16>, vector<128x128xbf16>, vector<8x128xf32> -> vector<8x128xf32>
    %137 = arith.addf %134, %136 : vector<8x128xf32>
    %138 = math.tanh %137 : vector<8x128xf32>
    %139 = arith.index_cast %c9_i32 : i32 to index
    %c0_99 = arith.constant 0 : index
    %c0_100 = arith.constant 0 : index
    %140 = vector.load %arg11[%139, %c0_99, %c0_100] : memref<16x8x128xf32, #tpu.memory_space<vmem>>, vector<1x8x128xf32>
    %141 = vector.shape_cast %140 : vector<1x8x128xf32> to vector<8x128xf32>
    %142 = vector.shape_cast %138 : vector<8x128xf32> to vector<1x8x128xf32>
    tpu.vector_store %arg11[%139, %c0_99, %c0_100], %142 {strides = array<i32>} : memref<16x8x128xf32, #tpu.memory_space<vmem>>, vector<1x8x128xf32>,
    %c0_101 = arith.constant 0 : index
    %c0_102 = arith.constant 0 : index
    %143 = vector.load %arg10[%c0_101, %c0_102] : memref<8x128xf32, #tpu.memory_space<vmem>>, vector<8x128xf32>
    tpu.vector_store %arg10[%c0_101, %c0_102], %138 {strides = array<i32>} : memref<8x128xf32, #tpu.memory_space<vmem>>, vector<8x128xf32>,
    %c10_i32 = arith.constant 10 : i32
    %c0_103 = arith.constant 0 : index
    %c0_104 = arith.constant 0 : index
    %144 = vector.load %arg10[%c0_103, %c0_104] : memref<8x128xf32, #tpu.memory_space<vmem>>, vector<8x128xf32>
    %145 = arith.index_cast %c10_i32 : i32 to index
    %c0_105 = arith.constant 0 : index
    %c0_106 = arith.constant 0 : index
    %146 = vector.load %arg11[%145, %c0_105, %c0_106] : memref<16x8x128xf32, #tpu.memory_space<vmem>>, vector<1x8x128xf32>
    %147 = vector.shape_cast %146 : vector<1x8x128xf32> to vector<8x128xf32>
    %148 = arith.truncf %144 : vector<8x128xf32> to vector<8x128xbf16>
    %cst_107 = arith.constant dense<0.000000e+00> : vector<8x128xf32>
    %149 = tpu.matmul %148, %13, %cst_107 {dimension_numbers = #tpu.dot_dimension_numbers<[1], [0], [0], [1], [0, 0, 1, 1], [], []>} : vector<8x128xbf16>, vector<128x128xbf16>, vector<8x128xf32> -> vector<8x128xf32>
    %150 = arith.addf %147, %149 : vector<8x128xf32>
    %151 = math.tanh %150 : vector<8x128xf32>
    %152 = arith.index_cast %c10_i32 : i32 to index
    %c0_108 = arith.constant 0 : index
    %c0_109 = arith.constant 0 : index
    %153 = vector.load %arg11[%152, %c0_108, %c0_109] : memref<16x8x128xf32, #tpu.memory_space<vmem>>, vector<1x8x128xf32>
    %154 = vector.shape_cast %153 : vector<1x8x128xf32> to vector<8x128xf32>
    %155 = vector.shape_cast %151 : vector<8x128xf32> to vector<1x8x128xf32>
    tpu.vector_store %arg11[%152, %c0_108, %c0_109], %155 {strides = array<i32>} : memref<16x8x128xf32, #tpu.memory_space<vmem>>, vector<1x8x128xf32>,
    %c0_110 = arith.constant 0 : index
    %c0_111 = arith.constant 0 : index
    %156 = vector.load %arg10[%c0_110, %c0_111] : memref<8x128xf32, #tpu.memory_space<vmem>>, vector<8x128xf32>
    tpu.vector_store %arg10[%c0_110, %c0_111], %151 {strides = array<i32>} : memref<8x128xf32, #tpu.memory_space<vmem>>, vector<8x128xf32>,
    %c11_i32 = arith.constant 11 : i32
    %c0_112 = arith.constant 0 : index
    %c0_113 = arith.constant 0 : index
    %157 = vector.load %arg10[%c0_112, %c0_113] : memref<8x128xf32, #tpu.memory_space<vmem>>, vector<8x128xf32>
    %158 = arith.index_cast %c11_i32 : i32 to index
    %c0_114 = arith.constant 0 : index
    %c0_115 = arith.constant 0 : index
    %159 = vector.load %arg11[%158, %c0_114, %c0_115] : memref<16x8x128xf32, #tpu.memory_space<vmem>>, vector<1x8x128xf32>
    %160 = vector.shape_cast %159 : vector<1x8x128xf32> to vector<8x128xf32>
    %161 = arith.truncf %157 : vector<8x128xf32> to vector<8x128xbf16>
    %cst_116 = arith.constant dense<0.000000e+00> : vector<8x128xf32>
    %162 = tpu.matmul %161, %13, %cst_116 {dimension_numbers = #tpu.dot_dimension_numbers<[1], [0], [0], [1], [0, 0, 1, 1], [], []>} : vector<8x128xbf16>, vector<128x128xbf16>, vector<8x128xf32> -> vector<8x128xf32>
    %163 = arith.addf %160, %162 : vector<8x128xf32>
    %164 = math.tanh %163 : vector<8x128xf32>
    %165 = arith.index_cast %c11_i32 : i32 to index
    %c0_117 = arith.constant 0 : index
    %c0_118 = arith.constant 0 : index
    %166 = vector.load %arg11[%165, %c0_117, %c0_118] : memref<16x8x128xf32, #tpu.memory_space<vmem>>, vector<1x8x128xf32>
    %167 = vector.shape_cast %166 : vector<1x8x128xf32> to vector<8x128xf32>
    %168 = vector.shape_cast %164 : vector<8x128xf32> to vector<1x8x128xf32>
    tpu.vector_store %arg11[%165, %c0_117, %c0_118], %168 {strides = array<i32>} : memref<16x8x128xf32, #tpu.memory_space<vmem>>, vector<1x8x128xf32>,
    %c0_119 = arith.constant 0 : index
    %c0_120 = arith.constant 0 : index
    %169 = vector.load %arg10[%c0_119, %c0_120] : memref<8x128xf32, #tpu.memory_space<vmem>>, vector<8x128xf32>
    tpu.vector_store %arg10[%c0_119, %c0_120], %164 {strides = array<i32>} : memref<8x128xf32, #tpu.memory_space<vmem>>, vector<8x128xf32>,
    %c12_i32 = arith.constant 12 : i32
    %c0_121 = arith.constant 0 : index
    %c0_122 = arith.constant 0 : index
    %170 = vector.load %arg10[%c0_121, %c0_122] : memref<8x128xf32, #tpu.memory_space<vmem>>, vector<8x128xf32>
    %171 = arith.index_cast %c12_i32 : i32 to index
    %c0_123 = arith.constant 0 : index
    %c0_124 = arith.constant 0 : index
    %172 = vector.load %arg11[%171, %c0_123, %c0_124] : memref<16x8x128xf32, #tpu.memory_space<vmem>>, vector<1x8x128xf32>
    %173 = vector.shape_cast %172 : vector<1x8x128xf32> to vector<8x128xf32>
    %174 = arith.truncf %170 : vector<8x128xf32> to vector<8x128xbf16>
    %cst_125 = arith.constant dense<0.000000e+00> : vector<8x128xf32>
    %175 = tpu.matmul %174, %13, %cst_125 {dimension_numbers = #tpu.dot_dimension_numbers<[1], [0], [0], [1], [0, 0, 1, 1], [], []>} : vector<8x128xbf16>, vector<128x128xbf16>, vector<8x128xf32> -> vector<8x128xf32>
    %176 = arith.addf %173, %175 : vector<8x128xf32>
    %177 = math.tanh %176 : vector<8x128xf32>
    %178 = arith.index_cast %c12_i32 : i32 to index
    %c0_126 = arith.constant 0 : index
    %c0_127 = arith.constant 0 : index
    %179 = vector.load %arg11[%178, %c0_126, %c0_127] : memref<16x8x128xf32, #tpu.memory_space<vmem>>, vector<1x8x128xf32>
    %180 = vector.shape_cast %179 : vector<1x8x128xf32> to vector<8x128xf32>
    %181 = vector.shape_cast %177 : vector<8x128xf32> to vector<1x8x128xf32>
    tpu.vector_store %arg11[%178, %c0_126, %c0_127], %181 {strides = array<i32>} : memref<16x8x128xf32, #tpu.memory_space<vmem>>, vector<1x8x128xf32>,
    %c0_128 = arith.constant 0 : index
    %c0_129 = arith.constant 0 : index
    %182 = vector.load %arg10[%c0_128, %c0_129] : memref<8x128xf32, #tpu.memory_space<vmem>>, vector<8x128xf32>
    tpu.vector_store %arg10[%c0_128, %c0_129], %177 {strides = array<i32>} : memref<8x128xf32, #tpu.memory_space<vmem>>, vector<8x128xf32>,
    %c13_i32 = arith.constant 13 : i32
    %c0_130 = arith.constant 0 : index
    %c0_131 = arith.constant 0 : index
    %183 = vector.load %arg10[%c0_130, %c0_131] : memref<8x128xf32, #tpu.memory_space<vmem>>, vector<8x128xf32>
    %184 = arith.index_cast %c13_i32 : i32 to index
    %c0_132 = arith.constant 0 : index
    %c0_133 = arith.constant 0 : index
    %185 = vector.load %arg11[%184, %c0_132, %c0_133] : memref<16x8x128xf32, #tpu.memory_space<vmem>>, vector<1x8x128xf32>
    %186 = vector.shape_cast %185 : vector<1x8x128xf32> to vector<8x128xf32>
    %187 = arith.truncf %183 : vector<8x128xf32> to vector<8x128xbf16>
    %cst_134 = arith.constant dense<0.000000e+00> : vector<8x128xf32>
    %188 = tpu.matmul %187, %13, %cst_134 {dimension_numbers = #tpu.dot_dimension_numbers<[1], [0], [0], [1], [0, 0, 1, 1], [], []>} : vector<8x128xbf16>, vector<128x128xbf16>, vector<8x128xf32> -> vector<8x128xf32>
    %189 = arith.addf %186, %188 : vector<8x128xf32>
    %190 = math.tanh %189 : vector<8x128xf32>
    %191 = arith.index_cast %c13_i32 : i32 to index
    %c0_135 = arith.constant 0 : index
    %c0_136 = arith.constant 0 : index
    %192 = vector.load %arg11[%191, %c0_135, %c0_136] : memref<16x8x128xf32, #tpu.memory_space<vmem>>, vector<1x8x128xf32>
    %193 = vector.shape_cast %192 : vector<1x8x128xf32> to vector<8x128xf32>
    %194 = vector.shape_cast %190 : vector<8x128xf32> to vector<1x8x128xf32>
    tpu.vector_store %arg11[%191, %c0_135, %c0_136], %194 {strides = array<i32>} : memref<16x8x128xf32, #tpu.memory_space<vmem>>, vector<1x8x128xf32>,
    %c0_137 = arith.constant 0 : index
    %c0_138 = arith.constant 0 : index
    %195 = vector.load %arg10[%c0_137, %c0_138] : memref<8x128xf32, #tpu.memory_space<vmem>>, vector<8x128xf32>
    tpu.vector_store %arg10[%c0_137, %c0_138], %190 {strides = array<i32>} : memref<8x128xf32, #tpu.memory_space<vmem>>, vector<8x128xf32>,
    %c14_i32 = arith.constant 14 : i32
    %c0_139 = arith.constant 0 : index
    %c0_140 = arith.constant 0 : index
    %196 = vector.load %arg10[%c0_139, %c0_140] : memref<8x128xf32, #tpu.memory_space<vmem>>, vector<8x128xf32>
    %197 = arith.index_cast %c14_i32 : i32 to index
    %c0_141 = arith.constant 0 : index
    %c0_142 = arith.constant 0 : index
    %198 = vector.load %arg11[%197, %c0_141, %c0_142] : memref<16x8x128xf32, #tpu.memory_space<vmem>>, vector<1x8x128xf32>
    %199 = vector.shape_cast %198 : vector<1x8x128xf32> to vector<8x128xf32>
    %200 = arith.truncf %196 : vector<8x128xf32> to vector<8x128xbf16>
    %cst_143 = arith.constant dense<0.000000e+00> : vector<8x128xf32>
    %201 = tpu.matmul %200, %13, %cst_143 {dimension_numbers = #tpu.dot_dimension_numbers<[1], [0], [0], [1], [0, 0, 1, 1], [], []>} : vector<8x128xbf16>, vector<128x128xbf16>, vector<8x128xf32> -> vector<8x128xf32>
    %202 = arith.addf %199, %201 : vector<8x128xf32>
    %203 = math.tanh %202 : vector<8x128xf32>
    %204 = arith.index_cast %c14_i32 : i32 to index
    %c0_144 = arith.constant 0 : index
    %c0_145 = arith.constant 0 : index
    %205 = vector.load %arg11[%204, %c0_144, %c0_145] : memref<16x8x128xf32, #tpu.memory_space<vmem>>, vector<1x8x128xf32>
    %206 = vector.shape_cast %205 : vector<1x8x128xf32> to vector<8x128xf32>
    %207 = vector.shape_cast %203 : vector<8x128xf32> to vector<1x8x128xf32>
    tpu.vector_store %arg11[%204, %c0_144, %c0_145], %207 {strides = array<i32>} : memref<16x8x128xf32, #tpu.memory_space<vmem>>, vector<1x8x128xf32>,
    %c0_146 = arith.constant 0 : index
    %c0_147 = arith.constant 0 : index
    %208 = vector.load %arg10[%c0_146, %c0_147] : memref<8x128xf32, #tpu.memory_space<vmem>>, vector<8x128xf32>
    tpu.vector_store %arg10[%c0_146, %c0_147], %203 {strides = array<i32>} : memref<8x128xf32, #tpu.memory_space<vmem>>, vector<8x128xf32>,
    %c15_i32 = arith.constant 15 : i32
    %c0_148 = arith.constant 0 : index
    %c0_149 = arith.constant 0 : index
    %209 = vector.load %arg10[%c0_148, %c0_149] : memref<8x128xf32, #tpu.memory_space<vmem>>, vector<8x128xf32>
    %210 = arith.index_cast %c15_i32 : i32 to index
    %c0_150 = arith.constant 0 : index
    %c0_151 = arith.constant 0 : index
    %211 = vector.load %arg11[%210, %c0_150, %c0_151] : memref<16x8x128xf32, #tpu.memory_space<vmem>>, vector<1x8x128xf32>
    %212 = vector.shape_cast %211 : vector<1x8x128xf32> to vector<8x128xf32>
    %213 = arith.truncf %209 : vector<8x128xf32> to vector<8x128xbf16>
    %cst_152 = arith.constant dense<0.000000e+00> : vector<8x128xf32>
    %214 = tpu.matmul %213, %13, %cst_152 {dimension_numbers = #tpu.dot_dimension_numbers<[1], [0], [0], [1], [0, 0, 1, 1], [], []>} : vector<8x128xbf16>, vector<128x128xbf16>, vector<8x128xf32> -> vector<8x128xf32>
    %215 = arith.addf %212, %214 : vector<8x128xf32>
    %216 = math.tanh %215 : vector<8x128xf32>
    %217 = arith.index_cast %c15_i32 : i32 to index
    %c0_153 = arith.constant 0 : index
    %c0_154 = arith.constant 0 : index
    %218 = vector.load %arg11[%217, %c0_153, %c0_154] : memref<16x8x128xf32, #tpu.memory_space<vmem>>, vector<1x8x128xf32>
    %219 = vector.shape_cast %218 : vector<1x8x128xf32> to vector<8x128xf32>
    %220 = vector.shape_cast %216 : vector<8x128xf32> to vector<1x8x128xf32>
    tpu.vector_store %arg11[%217, %c0_153, %c0_154], %220 {strides = array<i32>} : memref<16x8x128xf32, #tpu.memory_space<vmem>>, vector<1x8x128xf32>,
    %c0_155 = arith.constant 0 : index
    %c0_156 = arith.constant 0 : index
    %221 = vector.load %arg10[%c0_155, %c0_156] : memref<8x128xf32, #tpu.memory_space<vmem>>, vector<8x128xf32>
    tpu.vector_store %arg10[%c0_155, %c0_156], %216 {strides = array<i32>} : memref<8x128xf32, #tpu.memory_space<vmem>>, vector<8x128xf32>,
    %c16_i32 = arith.constant 16 : i32
    %c0_157 = arith.constant 0 : index
    %c0_158 = arith.constant 0 : index
    %c0_159 = arith.constant 0 : index
    %222 = vector.load %arg11[%c0_157, %c0_158, %c0_159] : memref<16x8x128xf32, #tpu.memory_space<vmem>>, vector<16x8x128xf32>
    %223 = vector.shape_cast %222 : vector<16x8x128xf32> to vector<128x128xf32>
    %224 = arith.truncf %223 : vector<128x128xf32> to vector<128x128xbf16>
    %c0_160 = arith.constant 0 : index
    %c0_161 = arith.constant 0 : index
    %225 = vector.load %arg5[%c0_160, %c0_161] : memref<128x128xbf16, #tpu.memory_space<vmem>>, vector<128x128xbf16>
    %cst_162 = arith.constant dense<0.000000e+00> : vector<128x128xf32>
    %226 = tpu.matmul %224, %225, %cst_162 {dimension_numbers = #tpu.dot_dimension_numbers<[1], [0], [0], [1], [0, 0, 1, 1], [], []>} : vector<128x128xbf16>, vector<128x128xbf16>, vector<128x128xf32> -> vector<128x128xf32>
    %c0_163 = arith.constant 0 : index
    %c0_164 = arith.constant 0 : index
    %227 = vector.load %arg7[%c0_163, %c0_164] : memref<1x128xf32, #tpu.memory_space<vmem>>, vector<1x128xf32>
    %228 = vector.broadcast %227 : vector<1x128xf32> to vector<128x128xf32>
    %229 = arith.addf %226, %228 : vector<128x128xf32>
    %230 = arith.addf %229, %4 : vector<128x128xf32>
    %231 = vector.shape_cast %230 : vector<128x128xf32> to vector<16x8x128xf32>
    %c0_165 = arith.constant 0 : index
    %c0_166 = arith.constant 0 : index
    %c0_167 = arith.constant 0 : index
    %232 = vector.load %arg8[%c0_165, %c0_166, %c0_167] : memref<16x8x128xf32, #tpu.memory_space<vmem>>, vector<16x8x128xf32>
    tpu.vector_store %arg8[%c0_165, %c0_166, %c0_167], %231 {strides = array<i32>} : memref<16x8x128xf32, #tpu.memory_space<vmem>>, vector<16x8x128xf32>,
    %c0_168 = arith.constant 0 : index
    %c0_169 = arith.constant 0 : index
    %233 = vector.load %arg10[%c0_168, %c0_169] : memref<8x128xf32, #tpu.memory_space<vmem>>, vector<8x128xf32>
    %c0_170 = arith.constant 0 : index
    %c0_171 = arith.constant 0 : index
    %234 = vector.load %arg9[%c0_170, %c0_171] : memref<8x128xf32, #tpu.memory_space<vmem>>, vector<8x128xf32>
    tpu.vector_store %arg9[%c0_170, %c0_171], %233 {strides = array<i32>} : memref<8x128xf32, #tpu.memory_space<vmem>>, vector<8x128xf32>,
    return
  }
  func.func @transform_0(%arg0: i32) -> (i32, i32, i32) {
    %c0_i32 = arith.constant 0 : i32
    %c0_i32_0 = arith.constant 0 : i32
    %c0_i32_1 = arith.constant 0 : i32
    return %arg0, %c0_i32, %c0_i32_0 : i32, i32, i32
  }
  func.func @transform_1(%arg0: i32) -> (i32, i32) {
    %c0_i32 = arith.constant 0 : i32
    %c0_i32_0 = arith.constant 0 : i32
    %c0_i32_1 = arith.constant 0 : i32
    return %c0_i32, %c0_i32_0 : i32, i32
  }
  func.func @transform_2(%arg0: i32) -> (i32, i32) {
    %c0_i32 = arith.constant 0 : i32
    %c0_i32_0 = arith.constant 0 : i32
    %c0_i32_1 = arith.constant 0 : i32
    return %c0_i32, %c0_i32_0 : i32, i32
  }
  func.func @transform_3(%arg0: i32) -> (i32, i32) {
    %c0_i32 = arith.constant 0 : i32
    %c0_i32_0 = arith.constant 0 : i32
    %c0_i32_1 = arith.constant 0 : i32
    return %c0_i32, %c0_i32_0 : i32, i32
  }
  func.func @transform_4(%arg0: i32) -> (i32, i32) {
    %c0_i32 = arith.constant 0 : i32
    %c0_i32_0 = arith.constant 0 : i32
    %c0_i32_1 = arith.constant 0 : i32
    return %c0_i32, %c0_i32_0 : i32, i32
  }
  func.func @transform_5(%arg0: i32) -> (i32, i32) {
    %c0_i32 = arith.constant 0 : i32
    %c0_i32_0 = arith.constant 0 : i32
    %c0_i32_1 = arith.constant 0 : i32
    return %c0_i32, %c0_i32_0 : i32, i32
  }
  func.func @transform_6(%arg0: i32) -> (i32, i32) {
    %c0_i32 = arith.constant 0 : i32
    %c0_i32_0 = arith.constant 0 : i32
    %c0_i32_1 = arith.constant 0 : i32
    return %c0_i32, %c0_i32_0 : i32, i32
  }
  func.func @transform_7(%arg0: i32) -> (i32, i32, i32) {
    %c0_i32 = arith.constant 0 : i32
    %c0_i32_0 = arith.constant 0 : i32
    %c0_i32_1 = arith.constant 0 : i32
    return %arg0, %c0_i32, %c0_i32_0 : i32, i32, i32
  }
  func.func @transform_8(%arg0: i32) -> (i32, i32) {
    %c0_i32 = arith.constant 0 : i32
    %c0_i32_0 = arith.constant 0 : i32
    %c0_i32_1 = arith.constant 0 : i32
    return %c0_i32, %c0_i32_0 : i32, i32
  }
}

</mosaic_0001>

<llo_original>
// kernel: recurrent_model_with_skip_add_seq.1
$region0: #{recurrent_model_with_skip_add_seq.1}
  #allocation0 [shape = 'u32[]', space=smem, size = 0x4, offset = 0x4, fixed_abs, tag = 'smem constant byte address 0x4 - core index']
  #allocation1 [shape = 'u32[144,128]{1,0:T(1,128)}', space=vmem, size = 0x12000, scoped, tag = 'internal scratch']
  #allocation2 [shape = 'f32[8,128]{1,0:T(8,128)}', space=vmem, size = 0x1000, scoped, tag = 'scratch operand']
  #allocation3 [shape = 'f32[16,8,128]{2,1,0:T(8,128)}', space=vmem, size = 0x10000, scoped, tag = 'scratch operand']
  %s0 = inlined_call_operand.hbm [shape: f32[32,8,128], index: 0, kind: input, shape index: {}]
  %s1 = inlined_call_operand.hbm [shape: f32[8,128], index: 1, kind: input, shape index: {}]
  %s2 = inlined_call_operand.hbm [shape: bf16[128,128], index: 2, kind: input, shape index: {}]
  %s3 = inlined_call_operand.hbm [shape: bf16[128,128], index: 3, kind: input, shape index: {}]
  %s4 = inlined_call_operand.hbm [shape: bf16[128,128], index: 4, kind: input, shape index: {}]
  %s5 = inlined_call_operand.vmem [shape: f32[1,128], index: 5, kind: input, shape index: {}]
  %s6 = inlined_call_operand.vmem [shape: f32[1,128], index: 6, kind: input, shape index: {}]
  %s7 = inlined_call_operand.hbm [shape: f32[32,8,128], index: 7, kind: output, shape index: {0}]
  %s8 = inlined_call_operand.hbm [shape: f32[8,128], index: 8, kind: output, shape index: {1}]
  %9 = xla_tuple %s7, %s8
  %s10 = sld [smem:[#allocation0]]
  $region93: #{recurrent_model_with_skip_add_seq.1} parent=0
    _
  %s12 = ssub.s32 1, %s10
  %s13 = scalar_select 0, %s12, %s10
  $region1: #{recurrent_model_with_skip_add_seq.1} parent=0
    #allocation4 [shape = 'u8[131072]{0}', space=vmem, size = 0x20000, scoped, tag = 'input window, operand 0']
    #allocation5 [shape = 's32[2]{0}', space=sflag, size = 0x8, scoped, tag = 'scoped memory for recurrent_model_with_skip_add_seq.1']
    #allocation6 [shape = 's32[2]{0}', space=sflag, size = 0x8, scoped, tag = 'scoped memory for recurrent_model_with_skip_add_seq.1']
    #allocation7 [shape = 'u8[4096]{0}', space=vmem, size = 0x1000, scoped, tag = 'input window, operand 1, single buffered']
    #allocation8 [shape = 's32[1]{0}', space=sflag, size = 0x4, scoped, tag = 'scoped memory for recurrent_model_with_skip_add_seq.1']
    #allocation9 [shape = 'u8[32768]{0}', space=vmem, size = 0x8000, scoped, tag = 'input window, operand 2, single buffered']
    #allocation10 [shape = 'u8[32768]{0}', space=vmem, size = 0x8000, scoped, tag = 'input window, operand 3, single buffered']
    #allocation11 [shape = 's32[1]{0}', space=sflag, size = 0x4, scoped, tag = 'scoped memory for recurrent_model_with_skip_add_seq.1']
    #allocation12 [shape = 'u8[32768]{0}', space=vmem, size = 0x8000, scoped, tag = 'input window, operand 4, single buffered']
    #allocation13 [shape = 'u8[131072]{0}', space=vmem, size = 0x20000, scoped, tag = 'output window, operand 0']
    #allocation14 [shape = 'u8[4096]{0}', space=vmem, size = 0x1000, scoped, tag = 'output window, operand 1, single buffered']
    #allocation15 [shape = 's32[1]{0}', space=sflag, size = 0x4, scoped, tag = 'scoped memory for recurrent_model_with_skip_add_seq.1']
    %14 = vsyncpa [#allocation5], 0
    %s15 = scalar_lea.sflag [#allocation5], 1
    %16 = vsyncpa %s15, 0
    %17 = vsyncpa [#allocation8], 0
    %18 = vsyncpa [#allocation11], 0
    %19 = vsyncpa [#allocation6], 0
    %s20 = scalar_lea.sflag [#allocation6], 1
    %21 = vsyncpa %s20, 0
    %22 = vsyncpa [#allocation15], 0
    loop: start=0, step=1, limit=4
    $region2: #{recurrent_model_with_skip_add_seq.1} parent=1 // loop_pre_header
      _
    $region3: #{recurrent_model_with_skip_add_seq.1} parent=1 // loop_header
      %s24 = sphi 0, %s28
      %p25 = scmp.ge.s32.totalorder %s24, 4
      %s34 = sphi 0, %s36
      %s37 = sphi 0, %s34
      %s38 = sphi 0, %s37
      %s54 = sphi 0, %s38
      %s58 = sphi 0, %s58
      %s60 = sphi 0, %s58
      %s61 = sphi 0, %s60
      %s75 = sphi 0, %s61
      %s79 = sphi 0, %s79
      %s81 = sphi 0, %s79
      %s82 = sphi 0, %s81
      %s96 = sphi 0, %s82
      %s100 = sphi 0, %s100
      %s102 = sphi 0, %s100
      %s103 = sphi 0, %s102
      %s117 = sphi 0, %s103
      %s121 = sphi 0, %s121
      %s123 = sphi 0, %s121
      %s124 = sphi 0, %s123
      %s138 = sphi 0, %s124
      %s142 = sphi 0, %s142
      %s144 = sphi 0, %s142
      %s145 = sphi 0, %s144
      %s159 = sphi 0, %s145
      %s163 = sphi 0, %s163
      %s165 = sphi 0, %s163
      %s166 = sphi 0, %s165
      %s180 = sphi 0, %s166
      %s186 = sphi 0, %s188
      %s189 = sphi 0, %s186
      %s190 = sphi 0, %s189
      %s206 = sphi 0, %s190
      %s210 = sphi 0, %s210
      %s212 = sphi 0, %s210
      %s213 = sphi 0, %s212
      %s227 = sphi 0, %s213
    $region4: #{recurrent_model_with_skip_add_seq.1} parent=1 // loop_header_branch
      %27 = sbr.rel (%p25) target = $region8
    $region5: #{recurrent_model_with_skip_add_seq.1} parent=1 // loop_body
      %s29 = ssub.s32 %s24, 1
      %s30 = ssub.s32 %s24, 2
      %s31 = sadd.s32 %s24, 1
      %s32 = ssub.s32 %s24, %s31
      %p33 = scmp.eq.s32.totalorder %s32, 0
      %s35 = sadd.s32 %s34, 1
      %s36 = scalar_select %p33, %s34, %s35
      %p39 = pneg %p33
      %p40 = scmp.eq.s32.totalorder %s24, 1
      %p41 = por %p39, %p40
      %p42 = scmp.ne.s32.totalorder %s34, %s37
      %p43 = scmp.eq.s32.totalorder %s24, 0
      %p44 = por %p42, %p43
      %p45 = scmp.ne.s32.totalorder %s34, %s37
      %p46 = scmp.eq.s32.totalorder %s29, 1
      %p47 = por %p45, %p46
      %p48 = scmp.ne.s32.totalorder %s37, %s38
      %p49 = scmp.eq.s32.totalorder %s29, 0
      %p50 = por %p48, %p49
      %p51 = scmp.ne.s32.totalorder %s37, %s38
      %p52 = scmp.eq.s32.totalorder %s30, 1
      %p53 = por %p51, %p52
      %p55 = scmp.ne.s32.totalorder %s38, %s54
      %p56 = scmp.eq.s32.totalorder %s30, 0
      %p57 = por %p55, %p56
      %s59 = sadd.s32 %s58, 1
      %p62 = scmp.eq.s32.totalorder %s24, 1
      %p63 = scmp.ne.s32.totalorder %s58, %s60
      %p64 = scmp.eq.s32.totalorder %s24, 0
      %p65 = por %p63, %p64
      %p66 = scmp.ne.s32.totalorder %s58, %s60
      %p67 = scmp.eq.s32.totalorder %s29, 1
      %p68 = por %p66, %p67
      %p69 = scmp.ne.s32.totalorder %s60, %s61
      %p70 = scmp.eq.s32.totalorder %s29, 0
      %p71 = por %p69, %p70
      %p72 = scmp.ne.s32.totalorder %s60, %s61
      %p73 = scmp.eq.s32.totalorder %s30, 1
      %p74 = por %p72, %p73
      %p76 = scmp.ne.s32.totalorder %s61, %s75
      %p77 = scmp.eq.s32.totalorder %s30, 0
      %p78 = por %p76, %p77
      %s80 = sadd.s32 %s79, 1
      %p83 = scmp.eq.s32.totalorder %s24, 1
      %p84 = scmp.ne.s32.totalorder %s79, %s81
      %p85 = scmp.eq.s32.totalorder %s24, 0
      %p86 = por %p84, %p85
      %p87 = scmp.ne.s32.totalorder %s79, %s81
      %p88 = scmp.eq.s32.totalorder %s29, 1
      %p89 = por %p87, %p88
      %p90 = scmp.ne.s32.totalorder %s81, %s82
      %p91 = scmp.eq.s32.totalorder %s29, 0
      %p92 = por %p90, %p91
      %p93 = scmp.ne.s32.totalorder %s81, %s82
      %p94 = scmp.eq.s32.totalorder %s30, 1
      %p95 = por %p93, %p94
      %p97 = scmp.ne.s32.totalorder %s82, %s96
      %p98 = scmp.eq.s32.totalorder %s30, 0
      %p99 = por %p97, %p98
      %s101 = sadd.s32 %s100, 1
      %p104 = scmp.eq.s32.totalorder %s24, 1
      %p105 = scmp.ne.s32.totalorder %s100, %s102
      %p106 = scmp.eq.s32.totalorder %s24, 0
      %p107 = por %p105, %p106
      %p108 = scmp.ne.s32.totalorder %s100, %s102
      %p109 = scmp.eq.s32.totalorder %s29, 1
      %p110 = por %p108, %p109
      %p111 = scmp.ne.s32.totalorder %s102, %s103
      %p112 = scmp.eq.s32.totalorder %s29, 0
      %p113 = por %p111, %p112
      %p114 = scmp.ne.s32.totalorder %s102, %s103
      %p115 = scmp.eq.s32.totalorder %s30, 1
      %p116 = por %p114, %p115
      %p118 = scmp.ne.s32.totalorder %s103, %s117
      %p119 = scmp.eq.s32.totalorder %s30, 0
      %p120 = por %p118, %p119
      %s122 = sadd.s32 %s121, 1
      %p125 = scmp.eq.s32.totalorder %s24, 1
      %p126 = scmp.ne.s32.totalorder %s121, %s123
      %p127 = scmp.eq.s32.totalorder %s24, 0
      %p128 = por %p126, %p127
      %p129 = scmp.ne.s32.totalorder %s121, %s123
      %p130 = scmp.eq.s32.totalorder %s29, 1
      %p131 = por %p129, %p130
      %p132 = scmp.ne.s32.totalorder %s123, %s124
      %p133 = scmp.eq.s32.totalorder %s29, 0
      %p134 = por %p132, %p133
      %p135 = scmp.ne.s32.totalorder %s123, %s124
      %p136 = scmp.eq.s32.totalorder %s30, 1
      %p137 = por %p135, %p136
      %p139 = scmp.ne.s32.totalorder %s124, %s138
      %p140 = scmp.eq.s32.totalorder %s30, 0
      %p141 = por %p139, %p140
      %s143 = sadd.s32 %s142, 1
      %p146 = scmp.eq.s32.totalorder %s24, 1
      %p147 = scmp.ne.s32.totalorder %s142, %s144
      %p148 = scmp.eq.s32.totalorder %s24, 0
      %p149 = por %p147, %p148
      %p150 = scmp.ne.s32.totalorder %s142, %s144
      %p151 = scmp.eq.s32.totalorder %s29, 1
      %p152 = por %p150, %p151
      %p153 = scmp.ne.s32.totalorder %s144, %s145
      %p154 = scmp.eq.s32.totalorder %s29, 0
      %p155 = por %p153, %p154
      %p156 = scmp.ne.s32.totalorder %s144, %s145
      %p157 = scmp.eq.s32.totalorder %s30, 1
      %p158 = por %p156, %p157
      %p160 = scmp.ne.s32.totalorder %s145, %s159
      %p161 = scmp.eq.s32.totalorder %s30, 0
      %p162 = por %p160, %p161
      %s164 = sadd.s32 %s163, 1
      %p167 = scmp.eq.s32.totalorder %s24, 1
      %p168 = scmp.ne.s32.totalorder %s163, %s165
      %p169 = scmp.eq.s32.totalorder %s24, 0
      %p170 = por %p168, %p169
      %p171 = scmp.ne.s32.totalorder %s163, %s165
      %p172 = scmp.eq.s32.totalorder %s29, 1
      %p173 = por %p171, %p172
      %p174 = scmp.ne.s32.totalorder %s165, %s166
      %p175 = scmp.eq.s32.totalorder %s29, 0
      %p176 = por %p174, %p175
      %p177 = scmp.ne.s32.totalorder %s165, %s166
      %p178 = scmp.eq.s32.totalorder %s30, 1
      %p179 = por %p177, %p178
      %p181 = scmp.ne.s32.totalorder %s166, %s180
      %p182 = scmp.eq.s32.totalorder %s30, 0
      %p183 = por %p181, %p182
      %s184 = ssub.s32 %s24, %s31
      %p185 = scmp.eq.s32.totalorder %s184, 0
      %s187 = sadd.s32 %s186, 1
      %s188 = scalar_select %p185, %s186, %s187
      %p191 = pneg %p185
      %p192 = scmp.eq.s32.totalorder %s24, 1
      %p193 = por %p191, %p192
      %p194 = scmp.ne.s32.totalorder %s186, %s189
      %p195 = scmp.eq.s32.totalorder %s24, 0
      %p196 = por %p194, %p195
      %p197 = scmp.ne.s32.totalorder %s186, %s189
      %p198 = scmp.eq.s32.totalorder %s29, 1
      %p199 = por %p197, %p198
      %p200 = scmp.ne.s32.totalorder %s189, %s190
      %p201 = scmp.eq.s32.totalorder %s29, 0
      %p202 = por %p200, %p201
      %p203 = scmp.ne.s32.totalorder %s189, %s190
      %p204 = scmp.eq.s32.totalorder %s30, 1
      %p205 = por %p203, %p204
      %p207 = scmp.ne.s32.totalorder %s190, %s206
      %p208 = scmp.eq.s32.totalorder %s30, 0
      %p209 = por %p207, %p208
      %s211 = sadd.s32 %s210, 1
      %p214 = scmp.eq.s32.totalorder %s24, 1
      %p215 = scmp.ne.s32.totalorder %s210, %s212
      %p216 = scmp.eq.s32.totalorder %s24, 0
      %p217 = por %p215, %p216
      %p218 = scmp.ne.s32.totalorder %s210, %s212
      %p219 = scmp.eq.s32.totalorder %s29, 1
      %p220 = por %p218, %p219
      %p221 = scmp.ne.s32.totalorder %s212, %s213
      %p222 = scmp.eq.s32.totalorder %s29, 0
      %p223 = por %p221, %p222
      %p224 = scmp.ne.s32.totalorder %s212, %s213
      %p225 = scmp.eq.s32.totalorder %s30, 1
      %p226 = por %p224, %p225
      %p228 = scmp.ne.s32.totalorder %s213, %s227
      %p229 = scmp.eq.s32.totalorder %s30, 0
      %p230 = por %p228, %p229
      %p231 = scmp.le.s32.totalorder 1, %s24
      %p232 = scmp.lt.s32.totalorder %s24, 3
      %p233 = pnand %p231, %p232
      %p234 = pneg %p233
      // Predicated region
      $region9: #{recurrent_model_with_skip_add_seq.1} parent=5 // pred_check
        _
      $region10: #{recurrent_model_with_skip_add_seq.1} parent=5 // pred_check_branch
        %236 = sbr.rel (%p233) target = $region12
      $region11: #{recurrent_model_with_skip_add_seq.1} parent=5 // pred_region
        %s237 = ssub.s32 %s24, 1
        // Predicated region
        $region13: #{recurrent_model_with_skip_add_seq.1} parent=11 // pred_check
          %p238 = pneg %p71
        $region14: #{recurrent_model_with_skip_add_seq.1} parent=11 // pred_check_branch
          %240 = sbr.rel (%p238) target = $region16
        $region15: #{recurrent_model_with_skip_add_seq.1} parent=11 // pred_region
          %s242 = ssub.s32 128, 128
          %243 = vsyncadd [#allocation8], %s242
          %s245 = sshll.u32 [#allocation7], 4
          %s246 = int_to_ptr.vmem [resolvable:$true] %s245
          %248 = dma.hbm_to_vmem [thread:$0]  %s1, 128, %s246, [#allocation8]
        $region16: #{recurrent_model_with_skip_add_seq.1} parent=11 // pred_fallthru
          _
        // Predicated region
        $region17: #{recurrent_model_with_skip_add_seq.1} parent=11 // pred_check
          %p249 = pneg %p92
        $region18: #{recurrent_model_with_skip_add_seq.1} parent=11 // pred_check_branch
          %251 = sbr.rel (%p249) target = $region20
        $region19: #{recurrent_model_with_skip_add_seq.1} parent=11 // pred_region
          %s253 = ssub.s32 1024, 1024
          %254 = vsyncadd [#allocation8], %s253
          %s255 = sshll.u32 [#allocation9], 4
          %s256 = int_to_ptr.vmem [resolvable:$true] %s255
          %261 = dma.hbm_to_vmem [thread:$0]  %s2, 1024, %s256, [#allocation8], 64, 64, 4
        $region20: #{recurrent_model_with_skip_add_seq.1} parent=11 // pred_fallthru
          _
        // Predicated region
        $region21: #{recurrent_model_with_skip_add_seq.1} parent=11 // pred_check
          %p262 = pneg %p113
        $region22: #{recurrent_model_with_skip_add_seq.1} parent=11 // pred_check_branch
          %264 = sbr.rel (%p262) target = $region24
        $region23: #{recurrent_model_with_skip_add_seq.1} parent=11 // pred_region
          %s266 = ssub.s32 1024, 1024
          %267 = vsyncadd [#allocation11], %s266
          %s268 = sshll.u32 [#allocation10], 4
          %s269 = int_to_ptr.vmem [resolvable:$true] %s268
          %274 = dma.hbm_to_vmem [thread:$0]  %s3, 1024, %s269, [#allocation11], 64, 64, 4
        $region24: #{recurrent_model_with_skip_add_seq.1} parent=11 // pred_fallthru
          _
        // Predicated region
        $region25: #{recurrent_model_with_skip_add_seq.1} parent=11 // pred_check
          %p275 = pneg %p134
        $region26: #{recurrent_model_with_skip_add_seq.1} parent=11 // pred_check_branch
          %277 = sbr.rel (%p275) target = $region28
        $region27: #{recurrent_model_with_skip_add_seq.1} parent=11 // pred_region
          %s279 = ssub.s32 1024, 1024
          %280 = vsyncadd [#allocation11], %s279
          %s281 = sshll.u32 [#allocation12], 4
          %s282 = int_to_ptr.vmem [resolvable:$true] %s281
          %287 = dma.hbm_to_vmem [thread:$0]  %s4, 1024, %s282, [#allocation11], 64, 64, 4
        $region28: #{recurrent_model_with_skip_add_seq.1} parent=11 // pred_fallthru
          _
        // Predicated region
        $region29: #{recurrent_model_with_skip_add_seq.1} parent=11 // pred_check
          %p288 = pneg %p155
        $region30: #{recurrent_model_with_skip_add_seq.1} parent=11 // pred_check_branch
          %290 = sbr.rel (%p288) target = $region32
        $region31: #{recurrent_model_with_skip_add_seq.1} parent=11 // pred_region
          _
        $region32: #{recurrent_model_with_skip_add_seq.1} parent=11 // pred_fallthru
          _
        // Predicated region
        $region33: #{recurrent_model_with_skip_add_seq.1} parent=11 // pred_check
          %p291 = pneg %p176
        $region34: #{recurrent_model_with_skip_add_seq.1} parent=11 // pred_check_branch
          %293 = sbr.rel (%p291) target = $region36
        $region35: #{recurrent_model_with_skip_add_seq.1} parent=11 // pred_region
          _
        $region36: #{recurrent_model_with_skip_add_seq.1} parent=11 // pred_fallthru
          _
      $region12: #{recurrent_model_with_skip_add_seq.1} parent=5 // pred_fallthru
        _
      %p294 = scmp.lt.s32.totalorder %s24, 2
      // Predicated region
      $region37: #{recurrent_model_with_skip_add_seq.1} parent=5 // pred_check
        %p295 = pneg %p294
      $region38: #{recurrent_model_with_skip_add_seq.1} parent=5 // pred_check_branch
        %297 = sbr.rel (%p295) target = $region40
      $region39: #{recurrent_model_with_skip_add_seq.1} parent=5 // pred_region
        // Predicated region
        $region41: #{recurrent_model_with_skip_add_seq.1} parent=39 // pred_check
          %p298 = pneg %p44
        $region42: #{recurrent_model_with_skip_add_seq.1} parent=39 // pred_check_branch
          %300 = sbr.rel (%p298) target = $region44
        $region43: #{recurrent_model_with_skip_add_seq.1} parent=39 // pred_region
          %s301 = sand.u32 %s34, 1
          %s302 = scalar_lea.sflag [#allocation5], %s301
          %s303 = sand.u32 %s34, 1
          %s304 = smul.addr %s303, 128
          %s305 = scalar_lea.vmem [#allocation4], %s304
          %s306 = smul.u32 16, %s24
          %s308 = ssub.s32 2048, 2048
          %309 = vsyncadd %s302, %s308
          %s310 = smul.addr %s306, 128
          %s311 = scalar_lea.hbm %s0, %s310
          %s312 = sshll.u32 %s305, 4
          %s313 = int_to_ptr.vmem [resolvable:$true] %s312
          %318 = dma.hbm_to_vmem [thread:$0]  %s311, 2048, %s313, %s302, 128, 128, 8
        $region44: #{recurrent_model_with_skip_add_seq.1} parent=39 // pred_fallthru
          _
      $region40: #{recurrent_model_with_skip_add_seq.1} parent=5 // pred_fallthru
        _
      %p319 = scmp.le.s32.totalorder 1, %s24
      %p320 = scmp.lt.s32.totalorder %s24, 3
      %p321 = pnand %p319, %p320
      %p322 = pneg %p321
      // Predicated region
      $region45: #{recurrent_model_with_skip_add_seq.1} parent=5 // pred_check
        _
      $region46: #{recurrent_model_with_skip_add_seq.1} parent=5 // pred_check_branch
        %324 = sbr.rel (%p321) target = $region48
      $region47: #{recurrent_model_with_skip_add_seq.1} parent=5 // pred_region
        %s325 = ssub.s32 %s24, 1
        %s326 = sand.u32 %s37, 1
        %s327 = scalar_lea.sflag [#allocation5], %s326
        %s328 = sand.u32 %s37, 1
        %s329 = smul.addr %s328, 128
        %s330 = scalar_lea.vmem [#allocation4], %s329
        // Predicated region
        $region49: #{recurrent_model_with_skip_add_seq.1} parent=47 // pred_check
          %p331 = pneg %p50
        $region50: #{recurrent_model_with_skip_add_seq.1} parent=47 // pred_check_branch
          %333 = sbr.rel (%p331) target = $region52
        $region51: #{recurrent_model_with_skip_add_seq.1} parent=47 // pred_region
          %334 = dma.done %s327, 2048
        $region52: #{recurrent_model_with_skip_add_seq.1} parent=47 // pred_fallthru
          _
        // Predicated region
        $region53: #{recurrent_model_with_skip_add_seq.1} parent=47 // pred_check
          %p335 = pneg %p71
        $region54: #{recurrent_model_with_skip_add_seq.1} parent=47 // pred_check_branch
          %337 = sbr.rel (%p335) target = $region56
        $region55: #{recurrent_model_with_skip_add_seq.1} parent=47 // pred_region
          %338 = dma.done [#allocation8], 128
        $region56: #{recurrent_model_with_skip_add_seq.1} parent=47 // pred_fallthru
          _
        // Predicated region
        $region57: #{recurrent_model_with_skip_add_seq.1} parent=47 // pred_check
          %p339 = pneg %p92
        $region58: #{recurrent_model_with_skip_add_seq.1} parent=47 // pred_check_branch
          %341 = sbr.rel (%p339) target = $region60
        $region59: #{recurrent_model_with_skip_add_seq.1} parent=47 // pred_region
          %342 = dma.done [#allocation8], 1024
        $region60: #{recurrent_model_with_skip_add_seq.1} parent=47 // pred_fallthru
          _
        // Predicated region
        $region61: #{recurrent_model_with_skip_add_seq.1} parent=47 // pred_check
          %p343 = pneg %p113
        $region62: #{recurrent_model_with_skip_add_seq.1} parent=47 // pred_check_branch
          %345 = sbr.rel (%p343) target = $region64
        $region63: #{recurrent_model_with_skip_add_seq.1} parent=47 // pred_region
          %346 = dma.done [#allocation11], 1024
        $region64: #{recurrent_model_with_skip_add_seq.1} parent=47 // pred_fallthru
          _
        // Predicated region
        $region65: #{recurrent_model_with_skip_add_seq.1} parent=47 // pred_check
          %p347 = pneg %p134
        $region66: #{recurrent_model_with_skip_add_seq.1} parent=47 // pred_check_branch
          %349 = sbr.rel (%p347) target = $region68
        $region67: #{recurrent_model_with_skip_add_seq.1} parent=47 // pred_region
          %350 = dma.done [#allocation11], 1024
        $region68: #{recurrent_model_with_skip_add_seq.1} parent=47 // pred_fallthru
          _
        %s351 = sand.u32 %s37, 1
        %s352 = scalar_lea.sflag [#allocation5], %s351
        %s353 = sand.u32 %s37, 1
        %s354 = smul.addr %s353, 128
        %s355 = scalar_lea.vmem [#allocation4], %s354
        %p356 = pneg %p50
        %p357 = pneg %p47
        %p358 = pneg %p71
        %p359 = pneg %p68
        %p360 = pneg %p92
        %p361 = pneg %p89
        %p362 = pneg %p113
        %p363 = pneg %p110
        %p364 = pneg %p134
        %p365 = pneg %p131
        %p366 = pneg %p155
        %p367 = pneg %p152
        %p368 = pneg %p176
        %p369 = pneg %p173
        %p370 = pneg %p202
        %p371 = pneg %p199
        %s372 = sand.u32 %s189, 1
        %s373 = scalar_lea.sflag [#allocation6], %s372
        %s374 = sand.u32 %s189, 1
        %s375 = smul.addr %s374, 128
        %s376 = scalar_lea.vmem [#allocation13], %s375
        %p377 = pneg %p223
        %p378 = pneg %p220
        %s379 = smul.u32 16, %s29
        %s380 = smul.u32 16, %s29
        %p382 = scmp.eq.s32.totalorder %s29, 0
        // Predicated region
        $region69: #{recurrent_model_with_skip_add_seq.1} parent=47 // pred_check
          %p383 = pneg %p382
        $region70: #{recurrent_model_with_skip_add_seq.1} parent=47 // pred_check_branch
          %385 = sbr.rel (%p383) target = $region72
        $region71: #{recurrent_model_with_skip_add_seq.1} parent=47 // pred_region
          %v386 = vld [vmem:[#allocation7] sm:$0xff]
          %387 = vst [vmem:[#allocation2] sm:$0xff] %v386
        $region72: #{recurrent_model_with_skip_add_seq.1} parent=47 // pred_fallthru
          _
        %v388 = vld [vmem:[%s330] sm:$0xff]
        %v389 = vld [vmem:[%s330 + $0x8] sm:$0xff]
        %v390 = vld [vmem:[%s330 + $0x10] sm:$0xff]
        %v391 = vld [vmem:[%s330 + $0x18] sm:$0xff]
        %v392 = vld [vmem:[%s330 + $0x20] sm:$0xff]
        %v393 = vld [vmem:[%s330 + $0x28] sm:$0xff]
        %v394 = vld [vmem:[%s330 + $0x30] sm:$0xff]
        %v395 = vld [vmem:[%s330 + $0x38] sm:$0xff]
        %v396 = vld [vmem:[%s330 + $0x40] sm:$0xff]
        %v397 = vld [vmem:[%s330 + $0x48] sm:$0xff]
        %v398 = vld [vmem:[%s330 + $0x50] sm:$0xff]
        %v399 = vld [vmem:[%s330 + $0x58] sm:$0xff]
        %v400 = vld [vmem:[%s330 + $0x60] sm:$0xff]
        %v401 = vld [vmem:[%s330 + $0x68] sm:$0xff]
        %v402 = vld [vmem:[%s330 + $0x70] sm:$0xff]
        %v403 = vld [vmem:[%s330 + $0x78] sm:$0xff]
        %v404 = vpack.c.bf16 %v389, %v388
        %v405 = vpack.c.bf16 %v391, %v390
        %v406 = vpack.c.bf16 %v393, %v392
        %v407 = vpack.c.bf16 %v395, %v394
        %v408 = vpack.c.bf16 %v397, %v396
        %v409 = vpack.c.bf16 %v399, %v398
        %v410 = vpack.c.bf16 %v401, %v400
        %v411 = vpack.c.bf16 %v403, %v402
        %v412 = vld [vmem:[#allocation9] sm:$0xf]
        %v413 = vld [vmem:[#allocation9 + $0x4] sm:$0xf]
        %v414 = vld [vmem:[#allocation9 + $0x8] sm:$0xf]
        %v415 = vld [vmem:[#allocation9 + $0xc] sm:$0xf]
        %v416 = vld [vmem:[#allocation9 + $0x10] sm:$0xf]
        %v417 = vld [vmem:[#allocation9 + $0x14] sm:$0xf]
        %v418 = vld [vmem:[#allocation9 + $0x18] sm:$0xf]
        %v419 = vld [vmem:[#allocation9 + $0x1c] sm:$0xf]
        %v420 = vld [vmem:[#allocation9 + $0x20] sm:$0xf]
        %v421 = vld [vmem:[#allocation9 + $0x24] sm:$0xf]
        %v422 = vld [vmem:[#allocation9 + $0x28] sm:$0xf]
        %v423 = vld [vmem:[#allocation9 + $0x2c] sm:$0xf]
        %v424 = vld [vmem:[#allocation9 + $0x30] sm:$0xf]
        %v425 = vld [vmem:[#allocation9 + $0x34] sm:$0xf]
        %v426 = vld [vmem:[#allocation9 + $0x38] sm:$0xf]
        %v427 = vld [vmem:[#allocation9 + $0x3c] sm:$0xf]
        %v428 = vld [vmem:[%s5] sm:$0x1]
        %v430 = vlaneseq
        %v431 = vshrl.u32 %v430, 7
        %v432 = vsub.s32 0, %v431
        %v433 = vrot.slane %v428, %v432
        %v451 = vunpack.c.l.b16 %v412
        %v452 = vunpack.c.l.b16 %v413
        %v453 = vunpack.c.l.b16 %v414
        %v454 = vunpack.c.l.b16 %v415
        %v455 = vunpack.c.l.b16 %v416
        %v456 = vunpack.c.l.b16 %v417
        %v457 = vunpack.c.l.b16 %v418
        %v458 = vunpack.c.l.b16 %v419
        %v459 = vunpack.c.l.b16 %v420
        %v460 = vunpack.c.l.b16 %v421
        %v461 = vunpack.c.l.b16 %v422
        %v462 = vunpack.c.l.b16 %v423
        %v463 = vunpack.c.l.b16 %v424
        %v464 = vunpack.c.l.b16 %v425
        %v465 = vunpack.c.l.b16 %v426
        %v466 = vunpack.c.l.b16 %v427
        %v467 = vpack.c.b16 %v452, %v451
        %v468 = vpack.c.b16 %v454, %v453
        %v469 = vpack.c.b16 %v456, %v455
        %v470 = vpack.c.b16 %v458, %v457
        %v471 = vpack.c.b16 %v460, %v459
        %v472 = vpack.c.b16 %v462, %v461
        %v473 = vpack.c.b16 %v464, %v463
        %v474 = vpack.c.b16 %v466, %v465
        %483 = vmatprep.subr.bf16.mxu0 0
        %484 = vmatpush1.bf16.msra.mxu0 %v467
        %485 = vmatprep.subr.bf16.mxu0 0
        %486 = vmatpush1.bf16.msra.mxu0 %v468
        %487 = vmatprep.subr.bf16.mxu0 0
        %488 = vmatpush1.bf16.msra.mxu0 %v469
        %489 = vmatprep.subr.bf16.mxu0 0
        %490 = vmatpush1.bf16.msra.mxu0 %v470
        %491 = vmatprep.subr.bf16.mxu0 0
        %492 = vmatpush1.bf16.msra.mxu0 %v471
        %493 = vmatprep.subr.bf16.mxu0 0
        %494 = vmatpush1.bf16.msra.mxu0 %v472
        %495 = vmatprep.subr.bf16.mxu0 0
        %496 = vmatpush1.bf16.msra.mxu0 %v473
        %497 = vmatprep.subr.bf16.mxu0 0
        %498 = vmatpush1.bf16.msra.mxu0 %v474
        %499 = vmatprep.subr.bf16.mxu0 0
        %500 = vmatpush1.bf16.msra.mxu0 0
        %501 = vmatprep.subr.bf16.mxu0 0
        %502 = vmatpush1.bf16.msra.mxu0 0
        %503 = vmatprep.subr.bf16.mxu0 0
        %504 = vmatpush1.bf16.msra.mxu0 0
        %505 = vmatprep.subr.bf16.mxu0 0
        %506 = vmatpush1.bf16.msra.mxu0 0
        %507 = vmatprep.subr.bf16.mxu0 0
        %508 = vmatpush1.bf16.msra.mxu0 0
        %509 = vmatprep.subr.bf16.mxu0 0
        %510 = vmatpush1.bf16.msra.mxu0 0
        %511 = vmatprep.subr.bf16.mxu0 0
        %512 = vmatpush1.bf16.msra.mxu0 0
        %513 = vmatprep.subr.bf16.mxu0 0
        %514 = vmatpush1.bf16.msra.mxu0 0
        %515 = vmatprep.mubr.bf16.mxu0 0
        %516 = vmatmul.mubr.bf16.gmra.mrb[0].mxu0 %v404
        %v517 = vpop.f32.mrb[0].mxu0
        %v518 = vadd.f32 %v433, %v517
        %v519 = vpop.f32.mrb[0].mxu0
        %v520 = vpop.f32.mrb[0].mxu0
        %v521 = vadd.f32 %v433, %v520
        %v522 = vpop.f32.mrb[0].mxu0
        %523 = vmatprep.mubr.bf16.mxu0 0
        %524 = vmatmul.mubr.bf16.gmra.mrb[0].mxu0 %v405
        %v525 = vpop.f32.mrb[0].mxu0
        %v526 = vadd.f32 %v433, %v525
        %v527 = vpop.f32.mrb[0].mxu0
        %v528 = vpop.f32.mrb[0].mxu0
        %v529 = vadd.f32 %v433, %v528
        %v530 = vpop.f32.mrb[0].mxu0
        %531 = vmatprep.mubr.bf16.mxu0 0
        %532 = vmatmul.mubr.bf16.gmra.mrb[0].mxu0 %v406
        %v533 = vpop.f32.mrb[0].mxu0
        %v534 = vadd.f32 %v433, %v533
        %v535 = vpop.f32.mrb[0].mxu0
        %v536 = vpop.f32.mrb[0].mxu0
        %v537 = vadd.f32 %v433, %v536
        %v538 = vpop.f32.mrb[0].mxu0
        %539 = vmatprep.mubr.bf16.mxu0 0
        %540 = vmatmul.mubr.bf16.gmra.mrb[0].mxu0 %v407
        %v541 = vpop.f32.mrb[0].mxu0
        %v542 = vadd.f32 %v433, %v541
        %v543 = vpop.f32.mrb[0].mxu0
        %v544 = vpop.f32.mrb[0].mxu0
        %v545 = vadd.f32 %v433, %v544
        %v546 = vpop.f32.mrb[0].mxu0
        %547 = vmatprep.mubr.bf16.mxu0 0
        %548 = vmatmul.mubr.bf16.gmra.mrb[0].mxu0 %v408
        %v549 = vpop.f32.mrb[0].mxu0
        %v550 = vadd.f32 %v433, %v549
        %v551 = vpop.f32.mrb[0].mxu0
        %v552 = vpop.f32.mrb[0].mxu0
        %v553 = vadd.f32 %v433, %v552
        %v554 = vpop.f32.mrb[0].mxu0
        %555 = vmatprep.mubr.bf16.mxu0 0
        %556 = vmatmul.mubr.bf16.gmra.mrb[0].mxu0 %v409
        %v557 = vpop.f32.mrb[0].mxu0
        %v558 = vadd.f32 %v433, %v557
        %v559 = vpop.f32.mrb[0].mxu0
        %v560 = vpop.f32.mrb[0].mxu0
        %v561 = vadd.f32 %v433, %v560
        %v562 = vpop.f32.mrb[0].mxu0
        %563 = vmatprep.mubr.bf16.mxu0 0
        %564 = vmatmul.mubr.bf16.gmra.mrb[0].mxu0 %v410
        %v565 = vpop.f32.mrb[0].mxu0
        %v566 = vadd.f32 %v433, %v565
        %v567 = vpop.f32.mrb[0].mxu0
        %v568 = vpop.f32.mrb[0].mxu0
        %v569 = vadd.f32 %v433, %v568
        %v570 = vpop.f32.mrb[0].mxu0
        %571 = vmatprep.mubr.bf16.mxu0 0
        %572 = vmatmul.mubr.bf16.gmra.mrb[0].mxu0 %v411
        %v573 = vpop.f32.mrb[0].mxu0
        %v574 = vadd.f32 %v433, %v573
        %v575 = vpop.f32.mrb[0].mxu0
        %v576 = vpop.f32.mrb[0].mxu0
        %v577 = vadd.f32 %v433, %v576
        %v578 = vpop.f32.mrb[0].mxu0
        %579 = vdwg.mxu0
        %580 = vst [vmem:[#allocation3] sm:$0xff] %v518
        %581 = vst [vmem:[#allocation3 + $0x8] sm:$0xff] %v521
        %582 = vst [vmem:[#allocation3 + $0x10] sm:$0xff] %v526
        %583 = vst [vmem:[#allocation3 + $0x18] sm:$0xff] %v529
        %584 = vst [vmem:[#allocation3 + $0x20] sm:$0xff] %v534
        %585 = vst [vmem:[#allocation3 + $0x28] sm:$0xff] %v537
        %586 = vst [vmem:[#allocation3 + $0x30] sm:$0xff] %v542
        %587 = vst [vmem:[#allocation3 + $0x38] sm:$0xff] %v545
        %588 = vst [vmem:[#allocation3 + $0x40] sm:$0xff] %v550
        %589 = vst [vmem:[#allocation3 + $0x48] sm:$0xff] %v553
        %590 = vst [vmem:[#allocation3 + $0x50] sm:$0xff] %v558
        %591 = vst [vmem:[#allocation3 + $0x58] sm:$0xff] %v561
        %592 = vst [vmem:[#allocation3 + $0x60] sm:$0xff] %v566
        %593 = vst [vmem:[#allocation3 + $0x68] sm:$0xff] %v569
        %594 = vst [vmem:[#allocation3 + $0x70] sm:$0xff] %v574
        %595 = vst [vmem:[#allocation3 + $0x78] sm:$0xff] %v577
        %v596 = vld [vmem:[#allocation10] sm:$0xf]
        %v597 = vld [vmem:[#allocation10 + $0x4] sm:$0xf]
        %v598 = vld [vmem:[#allocation10 + $0x8] sm:$0xf]
        %v599 = vld [vmem:[#allocation10 + $0xc] sm:$0xf]
        %v600 = vld [vmem:[#allocation10 + $0x10] sm:$0xf]
        %v601 = vld [vmem:[#allocation10 + $0x14] sm:$0xf]
        %v602 = vld [vmem:[#allocation10 + $0x18] sm:$0xf]
        %v603 = vld [vmem:[#allocation10 + $0x1c] sm:$0xf]
        %v604 = vld [vmem:[#allocation10 + $0x20] sm:$0xf]
        %v605 = vld [vmem:[#allocation10 + $0x24] sm:$0xf]
        %v606 = vld [vmem:[#allocation10 + $0x28] sm:$0xf]
        %v607 = vld [vmem:[#allocation10 + $0x2c] sm:$0xf]
        %v608 = vld [vmem:[#allocation10 + $0x30] sm:$0xf]
        %v609 = vld [vmem:[#allocation10 + $0x34] sm:$0xf]
        %v610 = vld [vmem:[#allocation10 + $0x38] sm:$0xf]
        %v611 = vld [vmem:[#allocation10 + $0x3c] sm:$0xf]
        %v612 = vld [vmem:[#allocation2] sm:$0xff]
        %v613 = vld [vmem:[#allocation3] sm:$0xff]
        %v614 = vpack.c.bf16 %v612, %v612
        %v631 = vunpack.c.l.b16 %v596
        %v632 = vunpack.c.l.b16 %v597
        %v633 = vunpack.c.l.b16 %v598
        %v634 = vunpack.c.l.b16 %v599
        %v635 = vunpack.c.l.b16 %v600
        %v636 = vunpack.c.l.b16 %v601
        %v637 = vunpack.c.l.b16 %v602
        %v638 = vunpack.c.l.b16 %v603
        %v639 = vunpack.c.l.b16 %v604
        %v640 = vunpack.c.l.b16 %v605
        %v641 = vunpack.c.l.b16 %v606
        %v642 = vunpack.c.l.b16 %v607
        %v643 = vunpack.c.l.b16 %v608
        %v644 = vunpack.c.l.b16 %v609
        %v645 = vunpack.c.l.b16 %v610
        %v646 = vunpack.c.l.b16 %v611
        %v647 = vpack.c.b16 %v632, %v631
        %v648 = vpack.c.b16 %v634, %v633
        %v649 = vpack.c.b16 %v636, %v635
        %v650 = vpack.c.b16 %v638, %v637
        %v651 = vpack.c.b16 %v640, %v639
        %v652 = vpack.c.b16 %v642, %v641
        %v653 = vpack.c.b16 %v644, %v643
        %v654 = vpack.c.b16 %v646, %v645
        %663 = vmatprep.subr.bf16.mxu0 0
        %664 = vmatpush1.bf16.msra.mxu0 %v647
        %665 = vmatprep.subr.bf16.mxu0 0
        %666 = vmatpush1.bf16.msra.mxu0 %v648
        %667 = vmatprep.subr.bf16.mxu0 0
        %668 = vmatpush1.bf16.msra.mxu0 %v649
        %669 = vmatprep.subr.bf16.mxu0 0
        %670 = vmatpush1.bf16.msra.mxu0 %v650
        %671 = vmatprep.subr.bf16.mxu0 0
        %672 = vmatpush1.bf16.msra.mxu0 %v651
        %673 = vmatprep.subr.bf16.mxu0 0
        %674 = vmatpush1.bf16.msra.mxu0 %v652
        %675 = vmatprep.subr.bf16.mxu0 0
        %676 = vmatpush1.bf16.msra.mxu0 %v653
        %677 = vmatprep.subr.bf16.mxu0 0
        %678 = vmatpush1.bf16.msra.mxu0 %v654
        %679 = vmatprep.subr.bf16.mxu0 0
        %680 = vmatpush1.bf16.msra.mxu0 0
        %681 = vmatprep.subr.bf16.mxu0 0
        %682 = vmatpush1.bf16.msra.mxu0 0
        %683 = vmatprep.subr.bf16.mxu0 0
        %684 = vmatpush1.bf16.msra.mxu0 0
        %685 = vmatprep.subr.bf16.mxu0 0
        %686 = vmatpush1.bf16.msra.mxu0 0
        %687 = vmatprep.subr.bf16.mxu0 0
        %688 = vmatpush1.bf16.msra.mxu0 0
        %689 = vmatprep.subr.bf16.mxu0 0
        %690 = vmatpush1.bf16.msra.mxu0 0
        %691 = vmatprep.subr.bf16.mxu0 0
        %692 = vmatpush1.bf16.msra.mxu0 0
        %693 = vmatprep.subr.bf16.mxu0 0
        %694 = vmatpush1.bf16.msra.mxu0 0
        %695 = vmatprep.mubr.bf16.mxu0 0
        %696 = vmatmul.mubr.bf16.gmra.mrb[0].mxu0 %v614
        %v697 = vpop.f32.mrb[0].mxu0
        %v698 = vadd.f32 0.0, %v697
        %v699 = vpop.f32.mrb[0].mxu0
        %v700 = vpop.f32.mrb[0].mxu0
        %v701 = vpop.f32.mrb[0].mxu0
        %702 = vdwg.mxu0
        %v703 = vadd.f32 %v613, %v698
        %v704 = vtanh.pop %v703
        %705 = vst [vmem:[#allocation3] sm:$0xff] %v704
        %706 = vst [vmem:[#allocation2] sm:$0xff] %v704
        %v707 = vld [vmem:[#allocation2] sm:$0xff]
        %s708 = scalar_lea.vmem [#allocation3], 8
        %v709 = vld [vmem:[%s708] sm:$0xff]
        %v710 = vpack.c.bf16 %v707, %v707
        %711 = vmatprep.subr.bf16.mxu0 0
        %712 = vmatpush1.bf16.msra.mxu0 %v647
        %713 = vmatprep.subr.bf16.mxu0 0
        %714 = vmatpush1.bf16.msra.mxu0 %v648
        %715 = vmatprep.subr.bf16.mxu0 0
        %716 = vmatpush1.bf16.msra.mxu0 %v649
        %717 = vmatprep.subr.bf16.mxu0 0
        %718 = vmatpush1.bf16.msra.mxu0 %v650
        %719 = vmatprep.subr.bf16.mxu0 0
        %720 = vmatpush1.bf16.msra.mxu0 %v651
        %721 = vmatprep.subr.bf16.mxu0 0
        %722 = vmatpush1.bf16.msra.mxu0 %v652
        %723 = vmatprep.subr.bf16.mxu0 0
        %724 = vmatpush1.bf16.msra.mxu0 %v653
        %725 = vmatprep.subr.bf16.mxu0 0
        %726 = vmatpush1.bf16.msra.mxu0 %v654
        %727 = vmatprep.subr.bf16.mxu0 0
        %728 = vmatpush1.bf16.msra.mxu0 0
        %729 = vmatprep.subr.bf16.mxu0 0
        %730 = vmatpush1.bf16.msra.mxu0 0
        %731 = vmatprep.subr.bf16.mxu0 0
        %732 = vmatpush1.bf16.msra.mxu0 0
        %733 = vmatprep.subr.bf16.mxu0 0
        %734 = vmatpush1.bf16.msra.mxu0 0
        %735 = vmatprep.subr.bf16.mxu0 0
        %736 = vmatpush1.bf16.msra.mxu0 0
        %737 = vmatprep.subr.bf16.mxu0 0
        %738 = vmatpush1.bf16.msra.mxu0 0
        %739 = vmatprep.subr.bf16.mxu0 0
        %740 = vmatpush1.bf16.msra.mxu0 0
        %741 = vmatprep.subr.bf16.mxu0 0
        %742 = vmatpush1.bf16.msra.mxu0 0
        %743 = vmatprep.mubr.bf16.mxu0 0
        %744 = vmatmul.mubr.bf16.gmra.mrb[0].mxu0 %v710
        %v745 = vpop.f32.mrb[0].mxu0
        %v746 = vadd.f32 0.0, %v745
        %v747 = vpop.f32.mrb[0].mxu0
        %v748 = vpop.f32.mrb[0].mxu0
        %v749 = vpop.f32.mrb[0].mxu0
        %750 = vdwg.mxu0
        %v751 = vadd.f32 %v709, %v746
        %v752 = vtanh.pop %v751
        %753 = vst [vmem:[%s708] sm:$0xff] %v752
        %754 = vst [vmem:[#allocation2] sm:$0xff] %v752
        %v755 = vld [vmem:[#allocation2] sm:$0xff]
        %s756 = scalar_lea.vmem [#allocation3], 16
        %v757 = vld [vmem:[%s756] sm:$0xff]
        %v758 = vpack.c.bf16 %v755, %v755
        %759 = vmatprep.subr.bf16.mxu0 0
        %760 = vmatpush1.bf16.msra.mxu0 %v647
        %761 = vmatprep.subr.bf16.mxu0 0
        %762 = vmatpush1.bf16.msra.mxu0 %v648
        %763 = vmatprep.subr.bf16.mxu0 0
        %764 = vmatpush1.bf16.msra.mxu0 %v649
        %765 = vmatprep.subr.bf16.mxu0 0
        %766 = vmatpush1.bf16.msra.mxu0 %v650
        %767 = vmatprep.subr.bf16.mxu0 0
        %768 = vmatpush1.bf16.msra.mxu0 %v651
        %769 = vmatprep.subr.bf16.mxu0 0
        %770 = vmatpush1.bf16.msra.mxu0 %v652
        %771 = vmatprep.subr.bf16.mxu0 0
        %772 = vmatpush1.bf16.msra.mxu0 %v653
        %773 = vmatprep.subr.bf16.mxu0 0
        %774 = vmatpush1.bf16.msra.mxu0 %v654
        %775 = vmatprep.subr.bf16.mxu0 0
        %776 = vmatpush1.bf16.msra.mxu0 0
        %777 = vmatprep.subr.bf16.mxu0 0
        %778 = vmatpush1.bf16.msra.mxu0 0
        %779 = vmatprep.subr.bf16.mxu0 0
        %780 = vmatpush1.bf16.msra.mxu0 0
        %781 = vmatprep.subr.bf16.mxu0 0
        %782 = vmatpush1.bf16.msra.mxu0 0
        %783 = vmatprep.subr.bf16.mxu0 0
        %784 = vmatpush1.bf16.msra.mxu0 0
        %785 = vmatprep.subr.bf16.mxu0 0
        %786 = vmatpush1.bf16.msra.mxu0 0
        %787 = vmatprep.subr.bf16.mxu0 0
        %788 = vmatpush1.bf16.msra.mxu0 0
        %789 = vmatprep.subr.bf16.mxu0 0
        %790 = vmatpush1.bf16.msra.mxu0 0
        %791 = vmatprep.mubr.bf16.mxu0 0
        %792 = vmatmul.mubr.bf16.gmra.mrb[0].mxu0 %v758
        %v793 = vpop.f32.mrb[0].mxu0
        %v794 = vadd.f32 0.0, %v793
        %v795 = vpop.f32.mrb[0].mxu0
        %v796 = vpop.f32.mrb[0].mxu0
        %v797 = vpop.f32.mrb[0].mxu0
        %798 = vdwg.mxu0
        %v799 = vadd.f32 %v757, %v794
        %v800 = vtanh.pop %v799
        %801 = vst [vmem:[%s756] sm:$0xff] %v800
        %802 = vst [vmem:[#allocation2] sm:$0xff] %v800
        %v803 = vld [vmem:[#allocation2] sm:$0xff]
        %s804 = scalar_lea.vmem [#allocation3], 24
        %v805 = vld [vmem:[%s804] sm:$0xff]
        %v806 = vpack.c.bf16 %v803, %v803
        %807 = vmatprep.subr.bf16.mxu0 0
        %808 = vmatpush1.bf16.msra.mxu0 %v647
        %809 = vmatprep.subr.bf16.mxu0 0
        %810 = vmatpush1.bf16.msra.mxu0 %v648
        %811 = vmatprep.subr.bf16.mxu0 0
        %812 = vmatpush1.bf16.msra.mxu0 %v649
        %813 = vmatprep.subr.bf16.mxu0 0
        %814 = vmatpush1.bf16.msra.mxu0 %v650
        %815 = vmatprep.subr.bf16.mxu0 0
        %816 = vmatpush1.bf16.msra.mxu0 %v651
        %817 = vmatprep.subr.bf16.mxu0 0
        %818 = vmatpush1.bf16.msra.mxu0 %v652
        %819 = vmatprep.subr.bf16.mxu0 0
        %820 = vmatpush1.bf16.msra.mxu0 %v653
        %821 = vmatprep.subr.bf16.mxu0 0
        %822 = vmatpush1.bf16.msra.mxu0 %v654
        %823 = vmatprep.subr.bf16.mxu0 0
        %824 = vmatpush1.bf16.msra.mxu0 0
        %825 = vmatprep.subr.bf16.mxu0 0
        %826 = vmatpush1.bf16.msra.mxu0 0
        %827 = vmatprep.subr.bf16.mxu0 0
        %828 = vmatpush1.bf16.msra.mxu0 0
        %829 = vmatprep.subr.bf16.mxu0 0
        %830 = vmatpush1.bf16.msra.mxu0 0
        %831 = vmatprep.subr.bf16.mxu0 0
        %832 = vmatpush1.bf16.msra.mxu0 0
        %833 = vmatprep.subr.bf16.mxu0 0
        %834 = vmatpush1.bf16.msra.mxu0 0
        %835 = vmatprep.subr.bf16.mxu0 0
        %836 = vmatpush1.bf16.msra.mxu0 0
        %837 = vmatprep.subr.bf16.mxu0 0
        %838 = vmatpush1.bf16.msra.mxu0 0
        %839 = vmatprep.mubr.bf16.mxu0 0
        %840 = vmatmul.mubr.bf16.gmra.mrb[0].mxu0 %v806
        %v841 = vpop.f32.mrb[0].mxu0
        %v842 = vadd.f32 0.0, %v841
        %v843 = vpop.f32.mrb[0].mxu0
        %v844 = vpop.f32.mrb[0].mxu0
        %v845 = vpop.f32.mrb[0].mxu0
        %846 = vdwg.mxu0
        %v847 = vadd.f32 %v805, %v842
        %v848 = vtanh.pop %v847
        %849 = vst [vmem:[%s804] sm:$0xff] %v848
        %850 = vst [vmem:[#allocation2] sm:$0xff] %v848
        %v851 = vld [vmem:[#allocation2] sm:$0xff]
        %s852 = scalar_lea.vmem [#allocation3], 32
        %v853 = vld [vmem:[%s852] sm:$0xff]
        %v854 = vpack.c.bf16 %v851, %v851
        %855 = vmatprep.subr.bf16.mxu0 0
        %856 = vmatpush1.bf16.msra.mxu0 %v647
        %857 = vmatprep.subr.bf16.mxu0 0
        %858 = vmatpush1.bf16.msra.mxu0 %v648
        %859 = vmatprep.subr.bf16.mxu0 0
        %860 = vmatpush1.bf16.msra.mxu0 %v649
        %861 = vmatprep.subr.bf16.mxu0 0
        %862 = vmatpush1.bf16.msra.mxu0 %v650
        %863 = vmatprep.subr.bf16.mxu0 0
        %864 = vmatpush1.bf16.msra.mxu0 %v651
        %865 = vmatprep.subr.bf16.mxu0 0
        %866 = vmatpush1.bf16.msra.mxu0 %v652
        %867 = vmatprep.subr.bf16.mxu0 0
        %868 = vmatpush1.bf16.msra.mxu0 %v653
        %869 = vmatprep.subr.bf16.mxu0 0
        %870 = vmatpush1.bf16.msra.mxu0 %v654
        %871 = vmatprep.subr.bf16.mxu0 0
        %872 = vmatpush1.bf16.msra.mxu0 0
        %873 = vmatprep.subr.bf16.mxu0 0
        %874 = vmatpush1.bf16.msra.mxu0 0
        %875 = vmatprep.subr.bf16.mxu0 0
        %876 = vmatpush1.bf16.msra.mxu0 0
        %877 = vmatprep.subr.bf16.mxu0 0
        %878 = vmatpush1.bf16.msra.mxu0 0
        %879 = vmatprep.subr.bf16.mxu0 0
        %880 = vmatpush1.bf16.msra.mxu0 0
        %881 = vmatprep.subr.bf16.mxu0 0
        %882 = vmatpush1.bf16.msra.mxu0 0
        %883 = vmatprep.subr.bf16.mxu0 0
        %884 = vmatpush1.bf16.msra.mxu0 0
        %885 = vmatprep.subr.bf16.mxu0 0
        %886 = vmatpush1.bf16.msra.mxu0 0
        %887 = vmatprep.mubr.bf16.mxu0 0
        %888 = vmatmul.mubr.bf16.gmra.mrb[0].mxu0 %v854
        %v889 = vpop.f32.mrb[0].mxu0
        %v890 = vadd.f32 0.0, %v889
        %v891 = vpop.f32.mrb[0].mxu0
        %v892 = vpop.f32.mrb[0].mxu0
        %v893 = vpop.f32.mrb[0].mxu0
        %894 = vdwg.mxu0
        %v895 = vadd.f32 %v853, %v890
        %v896 = vtanh.pop %v895
        %897 = vst [vmem:[%s852] sm:$0xff] %v896
        %898 = vst [vmem:[#allocation2] sm:$0xff] %v896
        %v899 = vld [vmem:[#allocation2] sm:$0xff]
        %s900 = scalar_lea.vmem [#allocation3], 40
        %v901 = vld [vmem:[%s900] sm:$0xff]
        %v902 = vpack.c.bf16 %v899, %v899
        %903 = vmatprep.subr.bf16.mxu0 0
        %904 = vmatpush1.bf16.msra.mxu0 %v647
        %905 = vmatprep.subr.bf16.mxu0 0
        %906 = vmatpush1.bf16.msra.mxu0 %v648
        %907 = vmatprep.subr.bf16.mxu0 0
        %908 = vmatpush1.bf16.msra.mxu0 %v649
        %909 = vmatprep.subr.bf16.mxu0 0
        %910 = vmatpush1.bf16.msra.mxu0 %v650
        %911 = vmatprep.subr.bf16.mxu0 0
        %912 = vmatpush1.bf16.msra.mxu0 %v651
        %913 = vmatprep.subr.bf16.mxu0 0
        %914 = vmatpush1.bf16.msra.mxu0 %v652
        %915 = vmatprep.subr.bf16.mxu0 0
        %916 = vmatpush1.bf16.msra.mxu0 %v653
        %917 = vmatprep.subr.bf16.mxu0 0
        %918 = vmatpush1.bf16.msra.mxu0 %v654
        %919 = vmatprep.subr.bf16.mxu0 0
        %920 = vmatpush1.bf16.msra.mxu0 0
        %921 = vmatprep.subr.bf16.mxu0 0
        %922 = vmatpush1.bf16.msra.mxu0 0
        %923 = vmatprep.subr.bf16.mxu0 0
        %924 = vmatpush1.bf16.msra.mxu0 0
        %925 = vmatprep.subr.bf16.mxu0 0
        %926 = vmatpush1.bf16.msra.mxu0 0
        %927 = vmatprep.subr.bf16.mxu0 0
        %928 = vmatpush1.bf16.msra.mxu0 0
        %929 = vmatprep.subr.bf16.mxu0 0
        %930 = vmatpush1.bf16.msra.mxu0 0
        %931 = vmatprep.subr.bf16.mxu0 0
        %932 = vmatpush1.bf16.msra.mxu0 0
        %933 = vmatprep.subr.bf16.mxu0 0
        %934 = vmatpush1.bf16.msra.mxu0 0
        %935 = vmatprep.mubr.bf16.mxu0 0
        %936 = vmatmul.mubr.bf16.gmra.mrb[0].mxu0 %v902
        %v937 = vpop.f32.mrb[0].mxu0
        %v938 = vadd.f32 0.0, %v937
        %v939 = vpop.f32.mrb[0].mxu0
        %v940 = vpop.f32.mrb[0].mxu0
        %v941 = vpop.f32.mrb[0].mxu0
        %942 = vdwg.mxu0
        %v943 = vadd.f32 %v901, %v938
        %v944 = vtanh.pop %v943
        %945 = vst [vmem:[%s900] sm:$0xff] %v944
        %946 = vst [vmem:[#allocation2] sm:$0xff] %v944
        %v947 = vld [vmem:[#allocation2] sm:$0xff]
        %s948 = scalar_lea.vmem [#allocation3], 48
        %v949 = vld [vmem:[%s948] sm:$0xff]
        %v950 = vpack.c.bf16 %v947, %v947
        %951 = vmatprep.subr.bf16.mxu0 0
        %952 = vmatpush1.bf16.msra.mxu0 %v647
        %953 = vmatprep.subr.bf16.mxu0 0
        %954 = vmatpush1.bf16.msra.mxu0 %v648
        %955 = vmatprep.subr.bf16.mxu0 0
        %956 = vmatpush1.bf16.msra.mxu0 %v649
        %957 = vmatprep.subr.bf16.mxu0 0
        %958 = vmatpush1.bf16.msra.mxu0 %v650
        %959 = vmatprep.subr.bf16.mxu0 0
        %960 = vmatpush1.bf16.msra.mxu0 %v651
        %961 = vmatprep.subr.bf16.mxu0 0
        %962 = vmatpush1.bf16.msra.mxu0 %v652
        %963 = vmatprep.subr.bf16.mxu0 0
        %964 = vmatpush1.bf16.msra.mxu0 %v653
        %965 = vmatprep.subr.bf16.mxu0 0
        %966 = vmatpush1.bf16.msra.mxu0 %v654
        %967 = vmatprep.subr.bf16.mxu0 0
        %968 = vmatpush1.bf16.msra.mxu0 0
        %969 = vmatprep.subr.bf16.mxu0 0
        %970 = vmatpush1.bf16.msra.mxu0 0
        %971 = vmatprep.subr.bf16.mxu0 0
        %972 = vmatpush1.bf16.msra.mxu0 0
        %973 = vmatprep.subr.bf16.mxu0 0
        %974 = vmatpush1.bf16.msra.mxu0 0
        %975 = vmatprep.subr.bf16.mxu0 0
        %976 = vmatpush1.bf16.msra.mxu0 0
        %977 = vmatprep.subr.bf16.mxu0 0
        %978 = vmatpush1.bf16.msra.mxu0 0
        %979 = vmatprep.subr.bf16.mxu0 0
        %980 = vmatpush1.bf16.msra.mxu0 0
        %981 = vmatprep.subr.bf16.mxu0 0
        %982 = vmatpush1.bf16.msra.mxu0 0
        %983 = vmatprep.mubr.bf16.mxu0 0
        %984 = vmatmul.mubr.bf16.gmra.mrb[0].mxu0 %v950
        %v985 = vpop.f32.mrb[0].mxu0
        %v986 = vadd.f32 0.0, %v985
        %v987 = vpop.f32.mrb[0].mxu0
        %v988 = vpop.f32.mrb[0].mxu0
        %v989 = vpop.f32.mrb[0].mxu0
        %990 = vdwg.mxu0
        %v991 = vadd.f32 %v949, %v986
        %v992 = vtanh.pop %v991
        %993 = vst [vmem:[%s948] sm:$0xff] %v992
        %994 = vst [vmem:[#allocation2] sm:$0xff] %v992
        %v995 = vld [vmem:[#allocation2] sm:$0xff]
        %s996 = scalar_lea.vmem [#allocation3], 56
        %v997 = vld [vmem:[%s996] sm:$0xff]
        %v998 = vpack.c.bf16 %v995, %v995
        %999 = vmatprep.subr.bf16.mxu0 0
        %1000 = vmatpush1.bf16.msra.mxu0 %v647
        %1001 = vmatprep.subr.bf16.mxu0 0
        %1002 = vmatpush1.bf16.msra.mxu0 %v648
        %1003 = vmatprep.subr.bf16.mxu0 0
        %1004 = vmatpush1.bf16.msra.mxu0 %v649
        %1005 = vmatprep.subr.bf16.mxu0 0
        %1006 = vmatpush1.bf16.msra.mxu0 %v650
        %1007 = vmatprep.subr.bf16.mxu0 0
        %1008 = vmatpush1.bf16.msra.mxu0 %v651
        %1009 = vmatprep.subr.bf16.mxu0 0
        %1010 = vmatpush1.bf16.msra.mxu0 %v652
        %1011 = vmatprep.subr.bf16.mxu0 0
        %1012 = vmatpush1.bf16.msra.mxu0 %v653
        %1013 = vmatprep.subr.bf16.mxu0 0
        %1014 = vmatpush1.bf16.msra.mxu0 %v654
        %1015 = vmatprep.subr.bf16.mxu0 0
        %1016 = vmatpush1.bf16.msra.mxu0 0
        %1017 = vmatprep.subr.bf16.mxu0 0
        %1018 = vmatpush1.bf16.msra.mxu0 0
        %1019 = vmatprep.subr.bf16.mxu0 0
        %1020 = vmatpush1.bf16.msra.mxu0 0
        %1021 = vmatprep.subr.bf16.mxu0 0
        %1022 = vmatpush1.bf16.msra.mxu0 0
        %1023 = vmatprep.subr.bf16.mxu0 0
        %1024 = vmatpush1.bf16.msra.mxu0 0
        %1025 = vmatprep.subr.bf16.mxu0 0
        %1026 = vmatpush1.bf16.msra.mxu0 0
        %1027 = vmatprep.subr.bf16.mxu0 0
        %1028 = vmatpush1.bf16.msra.mxu0 0
        %1029 = vmatprep.subr.bf16.mxu0 0
        %1030 = vmatpush1.bf16.msra.mxu0 0
        %1031 = vmatprep.mubr.bf16.mxu0 0
        %1032 = vmatmul.mubr.bf16.gmra.mrb[0].mxu0 %v998
        %v1033 = vpop.f32.mrb[0].mxu0
        %v1034 = vadd.f32 0.0, %v1033
        %v1035 = vpop.f32.mrb[0].mxu0
        %v1036 = vpop.f32.mrb[0].mxu0
        %v1037 = vpop.f32.mrb[0].mxu0
        %1038 = vdwg.mxu0
        %v1039 = vadd.f32 %v997, %v1034
        %v1040 = vtanh.pop %v1039
        %1041 = vst [vmem:[%s996] sm:$0xff] %v1040
        %1042 = vst [vmem:[#allocation2] sm:$0xff] %v1040
        %v1043 = vld [vmem:[#allocation2] sm:$0xff]
        %s1044 = scalar_lea.vmem [#allocation3], 64
        %v1045 = vld [vmem:[%s1044] sm:$0xff]
        %v1046 = vpack.c.bf16 %v1043, %v1043
        %1047 = vmatprep.subr.bf16.mxu0 0
        %1048 = vmatpush1.bf16.msra.mxu0 %v647
        %1049 = vmatprep.subr.bf16.mxu0 0
        %1050 = vmatpush1.bf16.msra.mxu0 %v648
        %1051 = vmatprep.subr.bf16.mxu0 0
        %1052 = vmatpush1.bf16.msra.mxu0 %v649
        %1053 = vmatprep.subr.bf16.mxu0 0
        %1054 = vmatpush1.bf16.msra.mxu0 %v650
        %1055 = vmatprep.subr.bf16.mxu0 0
        %1056 = vmatpush1.bf16.msra.mxu0 %v651
        %1057 = vmatprep.subr.bf16.mxu0 0
        %1058 = vmatpush1.bf16.msra.mxu0 %v652
        %1059 = vmatprep.subr.bf16.mxu0 0
        %1060 = vmatpush1.bf16.msra.mxu0 %v653
        %1061 = vmatprep.subr.bf16.mxu0 0
        %1062 = vmatpush1.bf16.msra.mxu0 %v654
        %1063 = vmatprep.subr.bf16.mxu0 0
        %1064 = vmatpush1.bf16.msra.mxu0 0
        %1065 = vmatprep.subr.bf16.mxu0 0
        %1066 = vmatpush1.bf16.msra.mxu0 0
        %1067 = vmatprep.subr.bf16.mxu0 0
        %1068 = vmatpush1.bf16.msra.mxu0 0
        %1069 = vmatprep.subr.bf16.mxu0 0
        %1070 = vmatpush1.bf16.msra.mxu0 0
        %1071 = vmatprep.subr.bf16.mxu0 0
        %1072 = vmatpush1.bf16.msra.mxu0 0
        %1073 = vmatprep.subr.bf16.mxu0 0
        %1074 = vmatpush1.bf16.msra.mxu0 0
        %1075 = vmatprep.subr.bf16.mxu0 0
        %1076 = vmatpush1.bf16.msra.mxu0 0
        %1077 = vmatprep.subr.bf16.mxu0 0
        %1078 = vmatpush1.bf16.msra.mxu0 0
        %1079 = vmatprep.mubr.bf16.mxu0 0
        %1080 = vmatmul.mubr.bf16.gmra.mrb[0].mxu0 %v1046
        %v1081 = vpop.f32.mrb[0].mxu0
        %v1082 = vadd.f32 0.0, %v1081
        %v1083 = vpop.f32.mrb[0].mxu0
        %v1084 = vpop.f32.mrb[0].mxu0
        %v1085 = vpop.f32.mrb[0].mxu0
        %1086 = vdwg.mxu0
        %v1087 = vadd.f32 %v1045, %v1082
        %v1088 = vtanh.pop %v1087
        %1089 = vst [vmem:[%s1044] sm:$0xff] %v1088
        %1090 = vst [vmem:[#allocation2] sm:$0xff] %v1088
        %v1091 = vld [vmem:[#allocation2] sm:$0xff]
        %s1092 = scalar_lea.vmem [#allocation3], 72
        %v1093 = vld [vmem:[%s1092] sm:$0xff]
        %v1094 = vpack.c.bf16 %v1091, %v1091
        %1095 = vmatprep.subr.bf16.mxu0 0
        %1096 = vmatpush1.bf16.msra.mxu0 %v647
        %1097 = vmatprep.subr.bf16.mxu0 0
        %1098 = vmatpush1.bf16.msra.mxu0 %v648
        %1099 = vmatprep.subr.bf16.mxu0 0
        %1100 = vmatpush1.bf16.msra.mxu0 %v649
        %1101 = vmatprep.subr.bf16.mxu0 0
        %1102 = vmatpush1.bf16.msra.mxu0 %v650
        %1103 = vmatprep.subr.bf16.mxu0 0
        %1104 = vmatpush1.bf16.msra.mxu0 %v651
        %1105 = vmatprep.subr.bf16.mxu0 0
        %1106 = vmatpush1.bf16.msra.mxu0 %v652
        %1107 = vmatprep.subr.bf16.mxu0 0
        %1108 = vmatpush1.bf16.msra.mxu0 %v653
        %1109 = vmatprep.subr.bf16.mxu0 0
        %1110 = vmatpush1.bf16.msra.mxu0 %v654
        %1111 = vmatprep.subr.bf16.mxu0 0
        %1112 = vmatpush1.bf16.msra.mxu0 0
        %1113 = vmatprep.subr.bf16.mxu0 0
        %1114 = vmatpush1.bf16.msra.mxu0 0
        %1115 = vmatprep.subr.bf16.mxu0 0
        %1116 = vmatpush1.bf16.msra.mxu0 0
        %1117 = vmatprep.subr.bf16.mxu0 0
        %1118 = vmatpush1.bf16.msra.mxu0 0
        %1119 = vmatprep.subr.bf16.mxu0 0
        %1120 = vmatpush1.bf16.msra.mxu0 0
        %1121 = vmatprep.subr.bf16.mxu0 0
        %1122 = vmatpush1.bf16.msra.mxu0 0
        %1123 = vmatprep.subr.bf16.mxu0 0
        %1124 = vmatpush1.bf16.msra.mxu0 0
        %1125 = vmatprep.subr.bf16.mxu0 0
        %1126 = vmatpush1.bf16.msra.mxu0 0
        %1127 = vmatprep.mubr.bf16.mxu0 0
        %1128 = vmatmul.mubr.bf16.gmra.mrb[0].mxu0 %v1094
        %v1129 = vpop.f32.mrb[0].mxu0
        %v1130 = vadd.f32 0.0, %v1129
        %v1131 = vpop.f32.mrb[0].mxu0
        %v1132 = vpop.f32.mrb[0].mxu0
        %v1133 = vpop.f32.mrb[0].mxu0
        %1134 = vdwg.mxu0
        %v1135 = vadd.f32 %v1093, %v1130
        %v1136 = vtanh.pop %v1135
        %1137 = vst [vmem:[%s1092] sm:$0xff] %v1136
        %1138 = vst [vmem:[#allocation2] sm:$0xff] %v1136
        %v1139 = vld [vmem:[#allocation2] sm:$0xff]
        %s1140 = scalar_lea.vmem [#allocation3], 80
        %v1141 = vld [vmem:[%s1140] sm:$0xff]
        %v1142 = vpack.c.bf16 %v1139, %v1139
        %1143 = vmatprep.subr.bf16.mxu0 0
        %1144 = vmatpush1.bf16.msra.mxu0 %v647
        %1145 = vmatprep.subr.bf16.mxu0 0
        %1146 = vmatpush1.bf16.msra.mxu0 %v648
        %1147 = vmatprep.subr.bf16.mxu0 0
        %1148 = vmatpush1.bf16.msra.mxu0 %v649
        %1149 = vmatprep.subr.bf16.mxu0 0
        %1150 = vmatpush1.bf16.msra.mxu0 %v650
        %1151 = vmatprep.subr.bf16.mxu0 0
        %1152 = vmatpush1.bf16.msra.mxu0 %v651
        %1153 = vmatprep.subr.bf16.mxu0 0
        %1154 = vmatpush1.bf16.msra.mxu0 %v652
        %1155 = vmatprep.subr.bf16.mxu0 0
        %1156 = vmatpush1.bf16.msra.mxu0 %v653
        %1157 = vmatprep.subr.bf16.mxu0 0
        %1158 = vmatpush1.bf16.msra.mxu0 %v654
        %1159 = vmatprep.subr.bf16.mxu0 0
        %1160 = vmatpush1.bf16.msra.mxu0 0
        %1161 = vmatprep.subr.bf16.mxu0 0
        %1162 = vmatpush1.bf16.msra.mxu0 0
        %1163 = vmatprep.subr.bf16.mxu0 0
        %1164 = vmatpush1.bf16.msra.mxu0 0
        %1165 = vmatprep.subr.bf16.mxu0 0
        %1166 = vmatpush1.bf16.msra.mxu0 0
        %1167 = vmatprep.subr.bf16.mxu0 0
        %1168 = vmatpush1.bf16.msra.mxu0 0
        %1169 = vmatprep.subr.bf16.mxu0 0
        %1170 = vmatpush1.bf16.msra.mxu0 0
        %1171 = vmatprep.subr.bf16.mxu0 0
        %1172 = vmatpush1.bf16.msra.mxu0 0
        %1173 = vmatprep.subr.bf16.mxu0 0
        %1174 = vmatpush1.bf16.msra.mxu0 0
        %1175 = vmatprep.mubr.bf16.mxu0 0
        %1176 = vmatmul.mubr.bf16.gmra.mrb[0].mxu0 %v1142
        %v1177 = vpop.f32.mrb[0].mxu0
        %v1178 = vadd.f32 0.0, %v1177
        %v1179 = vpop.f32.mrb[0].mxu0
        %v1180 = vpop.f32.mrb[0].mxu0
        %v1181 = vpop.f32.mrb[0].mxu0
        %1182 = vdwg.mxu0
        %v1183 = vadd.f32 %v1141, %v1178
        %v1184 = vtanh.pop %v1183
        %1185 = vst [vmem:[%s1140] sm:$0xff] %v1184
        %1186 = vst [vmem:[#allocation2] sm:$0xff] %v1184
        %v1187 = vld [vmem:[#allocation2] sm:$0xff]
        %s1188 = scalar_lea.vmem [#allocation3], 88
        %v1189 = vld [vmem:[%s1188] sm:$0xff]
        %v1190 = vpack.c.bf16 %v1187, %v1187
        %1191 = vmatprep.subr.bf16.mxu0 0
        %1192 = vmatpush1.bf16.msra.mxu0 %v647
        %1193 = vmatprep.subr.bf16.mxu0 0
        %1194 = vmatpush1.bf16.msra.mxu0 %v648
        %1195 = vmatprep.subr.bf16.mxu0 0
        %1196 = vmatpush1.bf16.msra.mxu0 %v649
        %1197 = vmatprep.subr.bf16.mxu0 0
        %1198 = vmatpush1.bf16.msra.mxu0 %v650
        %1199 = vmatprep.subr.bf16.mxu0 0
        %1200 = vmatpush1.bf16.msra.mxu0 %v651
        %1201 = vmatprep.subr.bf16.mxu0 0
        %1202 = vmatpush1.bf16.msra.mxu0 %v652
        %1203 = vmatprep.subr.bf16.mxu0 0
        %1204 = vmatpush1.bf16.msra.mxu0 %v653
        %1205 = vmatprep.subr.bf16.mxu0 0
        %1206 = vmatpush1.bf16.msra.mxu0 %v654
        %1207 = vmatprep.subr.bf16.mxu0 0
        %1208 = vmatpush1.bf16.msra.mxu0 0
        %1209 = vmatprep.subr.bf16.mxu0 0
        %1210 = vmatpush1.bf16.msra.mxu0 0
        %1211 = vmatprep.subr.bf16.mxu0 0
        %1212 = vmatpush1.bf16.msra.mxu0 0
        %1213 = vmatprep.subr.bf16.mxu0 0
        %1214 = vmatpush1.bf16.msra.mxu0 0
        %1215 = vmatprep.subr.bf16.mxu0 0
        %1216 = vmatpush1.bf16.msra.mxu0 0
        %1217 = vmatprep.subr.bf16.mxu0 0
        %1218 = vmatpush1.bf16.msra.mxu0 0
        %1219 = vmatprep.subr.bf16.mxu0 0
        %1220 = vmatpush1.bf16.msra.mxu0 0
        %1221 = vmatprep.subr.bf16.mxu0 0
        %1222 = vmatpush1.bf16.msra.mxu0 0
        %1223 = vmatprep.mubr.bf16.mxu0 0
        %1224 = vmatmul.mubr.bf16.gmra.mrb[0].mxu0 %v1190
        %v1225 = vpop.f32.mrb[0].mxu0
        %v1226 = vadd.f32 0.0, %v1225
        %v1227 = vpop.f32.mrb[0].mxu0
        %v1228 = vpop.f32.mrb[0].mxu0
        %v1229 = vpop.f32.mrb[0].mxu0
        %1230 = vdwg.mxu0
        %v1231 = vadd.f32 %v1189, %v1226
        %v1232 = vtanh.pop %v1231
        %1233 = vst [vmem:[%s1188] sm:$0xff] %v1232
        %1234 = vst [vmem:[#allocation2] sm:$0xff] %v1232
        %v1235 = vld [vmem:[#allocation2] sm:$0xff]
        %s1236 = scalar_lea.vmem [#allocation3], 96
        %v1237 = vld [vmem:[%s1236] sm:$0xff]
        %v1238 = vpack.c.bf16 %v1235, %v1235
        %1239 = vmatprep.subr.bf16.mxu0 0
        %1240 = vmatpush1.bf16.msra.mxu0 %v647
        %1241 = vmatprep.subr.bf16.mxu0 0
        %1242 = vmatpush1.bf16.msra.mxu0 %v648
        %1243 = vmatprep.subr.bf16.mxu0 0
        %1244 = vmatpush1.bf16.msra.mxu0 %v649
        %1245 = vmatprep.subr.bf16.mxu0 0
        %1246 = vmatpush1.bf16.msra.mxu0 %v650
        %1247 = vmatprep.subr.bf16.mxu0 0
        %1248 = vmatpush1.bf16.msra.mxu0 %v651
        %1249 = vmatprep.subr.bf16.mxu0 0
        %1250 = vmatpush1.bf16.msra.mxu0 %v652
        %1251 = vmatprep.subr.bf16.mxu0 0
        %1252 = vmatpush1.bf16.msra.mxu0 %v653
        %1253 = vmatprep.subr.bf16.mxu0 0
        %1254 = vmatpush1.bf16.msra.mxu0 %v654
        %1255 = vmatprep.subr.bf16.mxu0 0
        %1256 = vmatpush1.bf16.msra.mxu0 0
        %1257 = vmatprep.subr.bf16.mxu0 0
        %1258 = vmatpush1.bf16.msra.mxu0 0
        %1259 = vmatprep.subr.bf16.mxu0 0
        %1260 = vmatpush1.bf16.msra.mxu0 0
        %1261 = vmatprep.subr.bf16.mxu0 0
        %1262 = vmatpush1.bf16.msra.mxu0 0
        %1263 = vmatprep.subr.bf16.mxu0 0
        %1264 = vmatpush1.bf16.msra.mxu0 0
        %1265 = vmatprep.subr.bf16.mxu0 0
        %1266 = vmatpush1.bf16.msra.mxu0 0
        %1267 = vmatprep.subr.bf16.mxu0 0
        %1268 = vmatpush1.bf16.msra.mxu0 0
        %1269 = vmatprep.subr.bf16.mxu0 0
        %1270 = vmatpush1.bf16.msra.mxu0 0
        %1271 = vmatprep.mubr.bf16.mxu0 0
        %1272 = vmatmul.mubr.bf16.gmra.mrb[0].mxu0 %v1238
        %v1273 = vpop.f32.mrb[0].mxu0
        %v1274 = vadd.f32 0.0, %v1273
        %v1275 = vpop.f32.mrb[0].mxu0
        %v1276 = vpop.f32.mrb[0].mxu0
        %v1277 = vpop.f32.mrb[0].mxu0
        %1278 = vdwg.mxu0
        %v1279 = vadd.f32 %v1237, %v1274
        %v1280 = vtanh.pop %v1279
        %1281 = vst [vmem:[%s1236] sm:$0xff] %v1280
        %1282 = vst [vmem:[#allocation2] sm:$0xff] %v1280
        %v1283 = vld [vmem:[#allocation2] sm:$0xff]
        %s1284 = scalar_lea.vmem [#allocation3], 104
        %v1285 = vld [vmem:[%s1284] sm:$0xff]
        %v1286 = vpack.c.bf16 %v1283, %v1283
        %1287 = vmatprep.subr.bf16.mxu0 0
        %1288 = vmatpush1.bf16.msra.mxu0 %v647
        %1289 = vmatprep.subr.bf16.mxu0 0
        %1290 = vmatpush1.bf16.msra.mxu0 %v648
        %1291 = vmatprep.subr.bf16.mxu0 0
        %1292 = vmatpush1.bf16.msra.mxu0 %v649
        %1293 = vmatprep.subr.bf16.mxu0 0
        %1294 = vmatpush1.bf16.msra.mxu0 %v650
        %1295 = vmatprep.subr.bf16.mxu0 0
        %1296 = vmatpush1.bf16.msra.mxu0 %v651
        %1297 = vmatprep.subr.bf16.mxu0 0
        %1298 = vmatpush1.bf16.msra.mxu0 %v652
        %1299 = vmatprep.subr.bf16.mxu0 0
        %1300 = vmatpush1.bf16.msra.mxu0 %v653
        %1301 = vmatprep.subr.bf16.mxu0 0
        %1302 = vmatpush1.bf16.msra.mxu0 %v654
        %1303 = vmatprep.subr.bf16.mxu0 0
        %1304 = vmatpush1.bf16.msra.mxu0 0
        %1305 = vmatprep.subr.bf16.mxu0 0
        %1306 = vmatpush1.bf16.msra.mxu0 0
        %1307 = vmatprep.subr.bf16.mxu0 0
        %1308 = vmatpush1.bf16.msra.mxu0 0
        %1309 = vmatprep.subr.bf16.mxu0 0
        %1310 = vmatpush1.bf16.msra.mxu0 0
        %1311 = vmatprep.subr.bf16.mxu0 0
        %1312 = vmatpush1.bf16.msra.mxu0 0
        %1313 = vmatprep.subr.bf16.mxu0 0
        %1314 = vmatpush1.bf16.msra.mxu0 0
        %1315 = vmatprep.subr.bf16.mxu0 0
        %1316 = vmatpush1.bf16.msra.mxu0 0
        %1317 = vmatprep.subr.bf16.mxu0 0
        %1318 = vmatpush1.bf16.msra.mxu0 0
        %1319 = vmatprep.mubr.bf16.mxu0 0
        %1320 = vmatmul.mubr.bf16.gmra.mrb[0].mxu0 %v1286
        %v1321 = vpop.f32.mrb[0].mxu0
        %v1322 = vadd.f32 0.0, %v1321
        %v1323 = vpop.f32.mrb[0].mxu0
        %v1324 = vpop.f32.mrb[0].mxu0
        %v1325 = vpop.f32.mrb[0].mxu0
        %1326 = vdwg.mxu0
        %v1327 = vadd.f32 %v1285, %v1322
        %v1328 = vtanh.pop %v1327
        %1329 = vst [vmem:[%s1284] sm:$0xff] %v1328
        %1330 = vst [vmem:[#allocation2] sm:$0xff] %v1328
        %v1331 = vld [vmem:[#allocation2] sm:$0xff]
        %s1332 = scalar_lea.vmem [#allocation3], 112
        %v1333 = vld [vmem:[%s1332] sm:$0xff]
        %v1334 = vpack.c.bf16 %v1331, %v1331
        %1335 = vmatprep.subr.bf16.mxu0 0
        %1336 = vmatpush1.bf16.msra.mxu0 %v647
        %1337 = vmatprep.subr.bf16.mxu0 0
        %1338 = vmatpush1.bf16.msra.mxu0 %v648
        %1339 = vmatprep.subr.bf16.mxu0 0
        %1340 = vmatpush1.bf16.msra.mxu0 %v649
        %1341 = vmatprep.subr.bf16.mxu0 0
        %1342 = vmatpush1.bf16.msra.mxu0 %v650
        %1343 = vmatprep.subr.bf16.mxu0 0
        %1344 = vmatpush1.bf16.msra.mxu0 %v651
        %1345 = vmatprep.subr.bf16.mxu0 0
        %1346 = vmatpush1.bf16.msra.mxu0 %v652
        %1347 = vmatprep.subr.bf16.mxu0 0
        %1348 = vmatpush1.bf16.msra.mxu0 %v653
        %1349 = vmatprep.subr.bf16.mxu0 0
        %1350 = vmatpush1.bf16.msra.mxu0 %v654
        %1351 = vmatprep.subr.bf16.mxu0 0
        %1352 = vmatpush1.bf16.msra.mxu0 0
        %1353 = vmatprep.subr.bf16.mxu0 0
        %1354 = vmatpush1.bf16.msra.mxu0 0
        %1355 = vmatprep.subr.bf16.mxu0 0
        %1356 = vmatpush1.bf16.msra.mxu0 0
        %1357 = vmatprep.subr.bf16.mxu0 0
        %1358 = vmatpush1.bf16.msra.mxu0 0
        %1359 = vmatprep.subr.bf16.mxu0 0
        %1360 = vmatpush1.bf16.msra.mxu0 0
        %1361 = vmatprep.subr.bf16.mxu0 0
        %1362 = vmatpush1.bf16.msra.mxu0 0
        %1363 = vmatprep.subr.bf16.mxu0 0
        %1364 = vmatpush1.bf16.msra.mxu0 0
        %1365 = vmatprep.subr.bf16.mxu0 0
        %1366 = vmatpush1.bf16.msra.mxu0 0
        %1367 = vmatprep.mubr.bf16.mxu0 0
        %1368 = vmatmul.mubr.bf16.gmra.mrb[0].mxu0 %v1334
        %v1369 = vpop.f32.mrb[0].mxu0
        %v1370 = vadd.f32 0.0, %v1369
        %v1371 = vpop.f32.mrb[0].mxu0
        %v1372 = vpop.f32.mrb[0].mxu0
        %v1373 = vpop.f32.mrb[0].mxu0
        %1374 = vdwg.mxu0
        %v1375 = vadd.f32 %v1333, %v1370
        %v1376 = vtanh.pop %v1375
        %1377 = vst [vmem:[%s1332] sm:$0xff] %v1376
        %1378 = vst [vmem:[#allocation2] sm:$0xff] %v1376
        %v1379 = vld [vmem:[#allocation2] sm:$0xff]
        %s1380 = scalar_lea.vmem [#allocation3], 120
        %v1381 = vld [vmem:[%s1380] sm:$0xff]
        %v1382 = vpack.c.bf16 %v1379, %v1379
        %1383 = vmatprep.subr.bf16.mxu0 0
        %1384 = vmatpush1.bf16.msra.mxu0 %v647
        %1385 = vmatprep.subr.bf16.mxu0 0
        %1386 = vmatpush1.bf16.msra.mxu0 %v648
        %1387 = vmatprep.subr.bf16.mxu0 0
        %1388 = vmatpush1.bf16.msra.mxu0 %v649
        %1389 = vmatprep.subr.bf16.mxu0 0
        %1390 = vmatpush1.bf16.msra.mxu0 %v650
        %1391 = vmatprep.subr.bf16.mxu0 0
        %1392 = vmatpush1.bf16.msra.mxu0 %v651
        %1393 = vmatprep.subr.bf16.mxu0 0
        %1394 = vmatpush1.bf16.msra.mxu0 %v652
        %1395 = vmatprep.subr.bf16.mxu0 0
        %1396 = vmatpush1.bf16.msra.mxu0 %v653
        %1397 = vmatprep.subr.bf16.mxu0 0
        %1398 = vmatpush1.bf16.msra.mxu0 %v654
        %1399 = vmatprep.subr.bf16.mxu0 0
        %1400 = vmatpush1.bf16.msra.mxu0 0
        %1401 = vmatprep.subr.bf16.mxu0 0
        %1402 = vmatpush1.bf16.msra.mxu0 0
        %1403 = vmatprep.subr.bf16.mxu0 0
        %1404 = vmatpush1.bf16.msra.mxu0 0
        %1405 = vmatprep.subr.bf16.mxu0 0
        %1406 = vmatpush1.bf16.msra.mxu0 0
        %1407 = vmatprep.subr.bf16.mxu0 0
        %1408 = vmatpush1.bf16.msra.mxu0 0
        %1409 = vmatprep.subr.bf16.mxu0 0
        %1410 = vmatpush1.bf16.msra.mxu0 0
        %1411 = vmatprep.subr.bf16.mxu0 0
        %1412 = vmatpush1.bf16.msra.mxu0 0
        %1413 = vmatprep.subr.bf16.mxu0 0
        %1414 = vmatpush1.bf16.msra.mxu0 0
        %1415 = vmatprep.mubr.bf16.mxu0 0
        %1416 = vmatmul.mubr.bf16.gmra.mrb[0].mxu0 %v1382
        %v1417 = vpop.f32.mrb[0].mxu0
        %v1418 = vadd.f32 0.0, %v1417
        %v1419 = vpop.f32.mrb[0].mxu0
        %v1420 = vpop.f32.mrb[0].mxu0
        %v1421 = vpop.f32.mrb[0].mxu0
        %1422 = vdwg.mxu0
        %v1423 = vadd.f32 %v1381, %v1418
        %v1424 = vtanh.pop %v1423
        %1425 = vst [vmem:[%s1380] sm:$0xff] %v1424
        %1426 = vst [vmem:[#allocation2] sm:$0xff] %v1424
        %v1427 = vld [vmem:[#allocation3] sm:$0xff]
        %v1428 = vld [vmem:[#allocation3 + $0x8] sm:$0xff]
        %v1429 = vld [vmem:[#allocation3 + $0x10] sm:$0xff]
        %v1430 = vld [vmem:[#allocation3 + $0x18] sm:$0xff]
        %v1431 = vld [vmem:[#allocation3 + $0x20] sm:$0xff]
        %v1432 = vld [vmem:[#allocation3 + $0x28] sm:$0xff]
        %v1433 = vld [vmem:[#allocation3 + $0x30] sm:$0xff]
        %v1434 = vld [vmem:[#allocation3 + $0x38] sm:$0xff]
        %v1435 = vld [vmem:[#allocation3 + $0x40] sm:$0xff]
        %v1436 = vld [vmem:[#allocation3 + $0x48] sm:$0xff]
        %v1437 = vld [vmem:[#allocation3 + $0x50] sm:$0xff]
        %v1438 = vld [vmem:[#allocation3 + $0x58] sm:$0xff]
        %v1439 = vld [vmem:[#allocation3 + $0x60] sm:$0xff]
        %v1440 = vld [vmem:[#allocation3 + $0x68] sm:$0xff]
        %v1441 = vld [vmem:[#allocation3 + $0x70] sm:$0xff]
        %v1442 = vld [vmem:[#allocation3 + $0x78] sm:$0xff]
        %v1443 = vpack.c.bf16 %v1428, %v1427
        %v1444 = vpack.c.bf16 %v1430, %v1429
        %v1445 = vpack.c.bf16 %v1432, %v1431
        %v1446 = vpack.c.bf16 %v1434, %v1433
        %v1447 = vpack.c.bf16 %v1436, %v1435
        %v1448 = vpack.c.bf16 %v1438, %v1437
        %v1449 = vpack.c.bf16 %v1440, %v1439
        %v1450 = vpack.c.bf16 %v1442, %v1441
        %v1451 = vld [vmem:[#allocation12] sm:$0xf]
        %v1452 = vld [vmem:[#allocation12 + $0x4] sm:$0xf]
        %v1453 = vld [vmem:[#allocation12 + $0x8] sm:$0xf]
        %v1454 = vld [vmem:[#allocation12 + $0xc] sm:$0xf]
        %v1455 = vld [vmem:[#allocation12 + $0x10] sm:$0xf]
        %v1456 = vld [vmem:[#allocation12 + $0x14] sm:$0xf]
        %v1457 = vld [vmem:[#allocation12 + $0x18] sm:$0xf]
        %v1458 = vld [vmem:[#allocation12 + $0x1c] sm:$0xf]
        %v1459 = vld [vmem:[#allocation12 + $0x20] sm:$0xf]
        %v1460 = vld [vmem:[#allocation12 + $0x24] sm:$0xf]
        %v1461 = vld [vmem:[#allocation12 + $0x28] sm:$0xf]
        %v1462 = vld [vmem:[#allocation12 + $0x2c] sm:$0xf]
        %v1463 = vld [vmem:[#allocation12 + $0x30] sm:$0xf]
        %v1464 = vld [vmem:[#allocation12 + $0x34] sm:$0xf]
        %v1465 = vld [vmem:[#allocation12 + $0x38] sm:$0xf]
        %v1466 = vld [vmem:[#allocation12 + $0x3c] sm:$0xf]
        %v1467 = vld [vmem:[%s6] sm:$0x1]
        %v1469 = vlaneseq
        %v1470 = vshrl.u32 %v1469, 7
        %v1471 = vsub.s32 0, %v1470
        %v1472 = vrot.slane %v1467, %v1471
        %v1490 = vunpack.c.l.b16 %v1451
        %v1491 = vunpack.c.l.b16 %v1452
        %v1492 = vunpack.c.l.b16 %v1453
        %v1493 = vunpack.c.l.b16 %v1454
        %v1494 = vunpack.c.l.b16 %v1455
        %v1495 = vunpack.c.l.b16 %v1456
        %v1496 = vunpack.c.l.b16 %v1457
        %v1497 = vunpack.c.l.b16 %v1458
        %v1498 = vunpack.c.l.b16 %v1459
        %v1499 = vunpack.c.l.b16 %v1460
        %v1500 = vunpack.c.l.b16 %v1461
        %v1501 = vunpack.c.l.b16 %v1462
        %v1502 = vunpack.c.l.b16 %v1463
        %v1503 = vunpack.c.l.b16 %v1464
        %v1504 = vunpack.c.l.b16 %v1465
        %v1505 = vunpack.c.l.b16 %v1466
        %v1506 = vpack.c.b16 %v1491, %v1490
        %v1507 = vpack.c.b16 %v1493, %v1492
        %v1508 = vpack.c.b16 %v1495, %v1494
        %v1509 = vpack.c.b16 %v1497, %v1496
        %v1510 = vpack.c.b16 %v1499, %v1498
        %v1511 = vpack.c.b16 %v1501, %v1500
        %v1512 = vpack.c.b16 %v1503, %v1502
        %v1513 = vpack.c.b16 %v1505, %v1504
        %1522 = vmatprep.subr.bf16.mxu0 0
        %1523 = vmatpush1.bf16.msra.mxu0 %v1506
        %1524 = vmatprep.subr.bf16.mxu0 0
        %1525 = vmatpush1.bf16.msra.mxu0 %v1507
        %1526 = vmatprep.subr.bf16.mxu0 0
        %1527 = vmatpush1.bf16.msra.mxu0 %v1508
        %1528 = vmatprep.subr.bf16.mxu0 0
        %1529 = vmatpush1.bf16.msra.mxu0 %v1509
        %1530 = vmatprep.subr.bf16.mxu0 0
        %1531 = vmatpush1.bf16.msra.mxu0 %v1510
        %1532 = vmatprep.subr.bf16.mxu0 0
        %1533 = vmatpush1.bf16.msra.mxu0 %v1511
        %1534 = vmatprep.subr.bf16.mxu0 0
        %1535 = vmatpush1.bf16.msra.mxu0 %v1512
        %1536 = vmatprep.subr.bf16.mxu0 0
        %1537 = vmatpush1.bf16.msra.mxu0 %v1513
        %1538 = vmatprep.subr.bf16.mxu0 0
        %1539 = vmatpush1.bf16.msra.mxu0 0
        %1540 = vmatprep.subr.bf16.mxu0 0
        %1541 = vmatpush1.bf16.msra.mxu0 0
        %1542 = vmatprep.subr.bf16.mxu0 0
        %1543 = vmatpush1.bf16.msra.mxu0 0
        %1544 = vmatprep.subr.bf16.mxu0 0
        %1545 = vmatpush1.bf16.msra.mxu0 0
        %1546 = vmatprep.subr.bf16.mxu0 0
        %1547 = vmatpush1.bf16.msra.mxu0 0
        %1548 = vmatprep.subr.bf16.mxu0 0
        %1549 = vmatpush1.bf16.msra.mxu0 0
        %1550 = vmatprep.subr.bf16.mxu0 0
        %1551 = vmatpush1.bf16.msra.mxu0 0
        %1552 = vmatprep.subr.bf16.mxu0 0
        %1553 = vmatpush1.bf16.msra.mxu0 0
        %1554 = vmatprep.mubr.bf16.mxu0 0
        %1555 = vmatmul.mubr.bf16.gmra.mrb[0].mxu0 %v1443
        %v1556 = vpop.f32.mrb[0].mxu0
        %v1557 = vadd.f32 %v1472, %v1556
        %v1558 = vpop.f32.mrb[0].mxu0
        %v1559 = vpop.f32.mrb[0].mxu0
        %v1560 = vadd.f32 %v1472, %v1559
        %v1561 = vpop.f32.mrb[0].mxu0
        %1562 = vmatprep.mubr.bf16.mxu0 0
        %1563 = vmatmul.mubr.bf16.gmra.mrb[0].mxu0 %v1444
        %v1564 = vpop.f32.mrb[0].mxu0
        %v1565 = vadd.f32 %v1472, %v1564
        %v1566 = vpop.f32.mrb[0].mxu0
        %v1567 = vpop.f32.mrb[0].mxu0
        %v1568 = vadd.f32 %v1472, %v1567
        %v1569 = vpop.f32.mrb[0].mxu0
        %1570 = vmatprep.mubr.bf16.mxu0 0
        %1571 = vmatmul.mubr.bf16.gmra.mrb[0].mxu0 %v1445
        %v1572 = vpop.f32.mrb[0].mxu0
        %v1573 = vadd.f32 %v1472, %v1572
        %v1574 = vpop.f32.mrb[0].mxu0
        %v1575 = vpop.f32.mrb[0].mxu0
        %v1576 = vadd.f32 %v1472, %v1575
        %v1577 = vpop.f32.mrb[0].mxu0
        %1578 = vmatprep.mubr.bf16.mxu0 0
        %1579 = vmatmul.mubr.bf16.gmra.mrb[0].mxu0 %v1446
        %v1580 = vpop.f32.mrb[0].mxu0
        %v1581 = vadd.f32 %v1472, %v1580
        %v1582 = vpop.f32.mrb[0].mxu0
        %v1583 = vpop.f32.mrb[0].mxu0
        %v1584 = vadd.f32 %v1472, %v1583
        %v1585 = vpop.f32.mrb[0].mxu0
        %1586 = vmatprep.mubr.bf16.mxu0 0
        %1587 = vmatmul.mubr.bf16.gmra.mrb[0].mxu0 %v1447
        %v1588 = vpop.f32.mrb[0].mxu0
        %v1589 = vadd.f32 %v1472, %v1588
        %v1590 = vpop.f32.mrb[0].mxu0
        %v1591 = vpop.f32.mrb[0].mxu0
        %v1592 = vadd.f32 %v1472, %v1591
        %v1593 = vpop.f32.mrb[0].mxu0
        %1594 = vmatprep.mubr.bf16.mxu0 0
        %1595 = vmatmul.mubr.bf16.gmra.mrb[0].mxu0 %v1448
        %v1596 = vpop.f32.mrb[0].mxu0
        %v1597 = vadd.f32 %v1472, %v1596
        %v1598 = vpop.f32.mrb[0].mxu0
        %v1599 = vpop.f32.mrb[0].mxu0
        %v1600 = vadd.f32 %v1472, %v1599
        %v1601 = vpop.f32.mrb[0].mxu0
        %1602 = vmatprep.mubr.bf16.mxu0 0
        %1603 = vmatmul.mubr.bf16.gmra.mrb[0].mxu0 %v1449
        %v1604 = vpop.f32.mrb[0].mxu0
        %v1605 = vadd.f32 %v1472, %v1604
        %v1606 = vpop.f32.mrb[0].mxu0
        %v1607 = vpop.f32.mrb[0].mxu0
        %v1608 = vadd.f32 %v1472, %v1607
        %v1609 = vpop.f32.mrb[0].mxu0
        %1610 = vmatprep.mubr.bf16.mxu0 0
        %1611 = vmatmul.mubr.bf16.gmra.mrb[0].mxu0 %v1450
        %v1612 = vpop.f32.mrb[0].mxu0
        %v1613 = vadd.f32 %v1472, %v1612
        %v1614 = vpop.f32.mrb[0].mxu0
        %v1615 = vpop.f32.mrb[0].mxu0
        %v1616 = vadd.f32 %v1472, %v1615
        %v1617 = vpop.f32.mrb[0].mxu0
        %1618 = vdwg.mxu0
        %v1619 = vadd.f32 %v1557, %v388
        %v1620 = vadd.f32 %v1560, %v389
        %v1621 = vadd.f32 %v1565, %v390
        %v1622 = vadd.f32 %v1568, %v391
        %v1623 = vadd.f32 %v1573, %v392
        %v1624 = vadd.f32 %v1576, %v393
        %v1625 = vadd.f32 %v1581, %v394
        %v1626 = vadd.f32 %v1584, %v395
        %v1627 = vadd.f32 %v1589, %v396
        %v1628 = vadd.f32 %v1592, %v397
        %v1629 = vadd.f32 %v1597, %v398
        %v1630 = vadd.f32 %v1600, %v399
        %v1631 = vadd.f32 %v1605, %v400
        %v1632 = vadd.f32 %v1608, %v401
        %v1633 = vadd.f32 %v1613, %v402
        %v1634 = vadd.f32 %v1616, %v403
        %1635 = vst [vmem:[%s376] sm:$0xff] %v1619
        %1636 = vst [vmem:[%s376 + $0x8] sm:$0xff] %v1620
        %1637 = vst [vmem:[%s376 + $0x10] sm:$0xff] %v1621
        %1638 = vst [vmem:[%s376 + $0x18] sm:$0xff] %v1622
        %1639 = vst [vmem:[%s376 + $0x20] sm:$0xff] %v1623
        %1640 = vst [vmem:[%s376 + $0x28] sm:$0xff] %v1624
        %1641 = vst [vmem:[%s376 + $0x30] sm:$0xff] %v1625
        %1642 = vst [vmem:[%s376 + $0x38] sm:$0xff] %v1626
        %1643 = vst [vmem:[%s376 + $0x40] sm:$0xff] %v1627
        %1644 = vst [vmem:[%s376 + $0x48] sm:$0xff] %v1628
        %1645 = vst [vmem:[%s376 + $0x50] sm:$0xff] %v1629
        %1646 = vst [vmem:[%s376 + $0x58] sm:$0xff] %v1630
        %1647 = vst [vmem:[%s376 + $0x60] sm:$0xff] %v1631
        %1648 = vst [vmem:[%s376 + $0x68] sm:$0xff] %v1632
        %1649 = vst [vmem:[%s376 + $0x70] sm:$0xff] %v1633
        %1650 = vst [vmem:[%s376 + $0x78] sm:$0xff] %v1634
        %v1651 = vld [vmem:[#allocation2] sm:$0xff]
        %1652 = vst [vmem:[#allocation14] sm:$0xff] %v1651
        %s1653 = sand.u32 %s189, 1
        %s1654 = scalar_lea.sflag [#allocation6], %s1653
        %s1655 = sand.u32 %s189, 1
        %s1656 = smul.addr %s1655, 128
        %s1657 = scalar_lea.vmem [#allocation13], %s1656
        // Predicated region
        $region73: #{recurrent_model_with_skip_add_seq.1} parent=47 // pred_check
          %p1658 = pneg %p199
        $region74: #{recurrent_model_with_skip_add_seq.1} parent=47 // pred_check_branch
          %1660 = sbr.rel (%p1658) target = $region76
        $region75: #{recurrent_model_with_skip_add_seq.1} parent=47 // pred_region
          %s1661 = smul.u32 16, %s29
          %s1663 = ssub.s32 2048, 2048
          %1664 = vsyncadd %s1654, %s1663
          %s1665 = smul.addr %s1661, 128
          %s1666 = scalar_lea.hbm %s7, %s1665
          %s1667 = sshll.u32 %s1657, 4
          %s1668 = int_to_ptr.vmem [resolvable:$true] %s1667
          %1673 = dma.vmem_to_hbm [thread:$0]  %s1668, 2048, %s1666, %s1654, 128, 128, 8
        $region76: #{recurrent_model_with_skip_add_seq.1} parent=47 // pred_fallthru
          _
        // Predicated region
        $region77: #{recurrent_model_with_skip_add_seq.1} parent=47 // pred_check
          %p1674 = pneg %p220
        $region78: #{recurrent_model_with_skip_add_seq.1} parent=47 // pred_check_branch
          %1676 = sbr.rel (%p1674) target = $region80
        $region79: #{recurrent_model_with_skip_add_seq.1} parent=47 // pred_region
          %s1678 = ssub.s32 128, 128
          %1679 = vsyncadd [#allocation15], %s1678
          %s1681 = sshll.u32 [#allocation14], 4
          %s1682 = int_to_ptr.vmem [resolvable:$true] %s1681
          %1684 = dma.vmem_to_hbm [thread:$0]  %s1682, 128, %s8, [#allocation15]
        $region80: #{recurrent_model_with_skip_add_seq.1} parent=47 // pred_fallthru
          _
        // Predicated region
        $region81: #{recurrent_model_with_skip_add_seq.1} parent=47 // pred_check
          %p1685 = pneg %p220
        $region82: #{recurrent_model_with_skip_add_seq.1} parent=47 // pred_check_branch
          %1687 = sbr.rel (%p1685) target = $region84
        $region83: #{recurrent_model_with_skip_add_seq.1} parent=47 // pred_region
          %1688 = dma.done [#allocation15], 128
        $region84: #{recurrent_model_with_skip_add_seq.1} parent=47 // pred_fallthru
          _
      $region48: #{recurrent_model_with_skip_add_seq.1} parent=5 // pred_fallthru
        _
      %p1689 = scmp.le.s32.totalorder 2, %s24
      // Predicated region
      $region85: #{recurrent_model_with_skip_add_seq.1} parent=5 // pred_check
        %p1690 = pneg %p1689
      $region86: #{recurrent_model_with_skip_add_seq.1} parent=5 // pred_check_branch
        %1692 = sbr.rel (%p1690) target = $region88
      $region87: #{recurrent_model_with_skip_add_seq.1} parent=5 // pred_region
        %s1693 = ssub.s32 %s24, 2
        // Predicated region
        $region89: #{recurrent_model_with_skip_add_seq.1} parent=87 // pred_check
          %p1694 = pneg %p205
        $region90: #{recurrent_model_with_skip_add_seq.1} parent=87 // pred_check_branch
          %1696 = sbr.rel (%p1694) target = $region92
        $region91: #{recurrent_model_with_skip_add_seq.1} parent=87 // pred_region
          %s1697 = sand.u32 %s190, 1
          %s1698 = scalar_lea.sflag [#allocation6], %s1697
          %s1699 = sand.u32 %s190, 1
          %s1700 = smul.addr %s1699, 128
          %s1701 = scalar_lea.vmem [#allocation13], %s1700
          %1702 = dma.done %s1698, 2048
        $region92: #{recurrent_model_with_skip_add_seq.1} parent=87 // pred_fallthru
          _
      $region88: #{recurrent_model_with_skip_add_seq.1} parent=5 // pred_fallthru
        _
    $region6: #{recurrent_model_with_skip_add_seq.1} parent=1 // loop_footer
      %s28 = sadd.s32 1, %s24
    $region7: #{recurrent_model_with_skip_add_seq.1} parent=1 // loop_footer_branch
      %23 = sbr.rel target = $region3
    $region8: #{recurrent_model_with_skip_add_seq.1} parent=1 // loop_exit
      _
    %1703 = vsyncpa [#allocation5], 1
    %s1704 = scalar_lea.sflag [#allocation5], 1
    %1705 = vsyncpa %s1704, 1
    %1706 = vsyncpa [#allocation8], 1
    %1707 = vsyncpa [#allocation11], 1
    %1708 = vsyncpa [#allocation6], 1
    %s1709 = scalar_lea.sflag [#allocation6], 1
    %1710 = vsyncpa %s1709, 1
    %1711 = vsyncpa [#allocation15], 1

</llo_original>
